<compile_context>
chip_gen: v7x
topology: tpu7x:2x2x1
jax: 0.10.0
libtpu: 0.0.40
codegen_flags: <defaults>
</compile_context>

<pallas_src>
import functools

import jax
import jax.numpy as jnp
from jax import lax
from jax.experimental import pallas as pl
from jax.experimental.pallas import tpu as pltpu

BETA = 0.01


def _fused_kernel(x_ref, dx_ref, g_ref, out_ref, w_ref, *, beta):
    """Fully fused per-ensemble-member kernel (p lives on the lane axis).

    x_ref  : (1, n, d)     X[i, j]
    dx_ref : (1, n, d)     DX[i, p]
    g_ref  : (1, d, d)     G[j, p]
    out_ref: (1, 1, d, d)  out[p, j]  (= W^T @ X)
    w_ref  : (1, d, d)     weights[j, p]
    """
    X = x_ref[0]                       # [n, d]
    DX = dx_ref[0]                     # [n, d]
    G = g_ref[0]                       # [d, d]   (j, p)
    d = G.shape[-1]
    f32 = jnp.float32

    # Contract the sample axis (axis 0) of both operands -> no .T needed.
    cdims = (((0,), (0,)), ((), ()))
    # S[j, c] = sum_i X[i, j] X[i, c]     (single MXU Gram)
    # M[j, p] = sum_i X[i, j] DX[i, p]    (single MXU cross term)
    S = lax.dot_general(X, X, cdims, preferred_element_type=f32)
    M = lax.dot_general(X, DX, cdims, preferred_element_type=f32)

    # Identity mask, built once per grid step; reused for ridge, the
    # elimination row mask and the final diagonal extraction.
    r_ix = lax.broadcasted_iota(jnp.int32, (d, d), 0)
    c_ix = lax.broadcasted_iota(jnp.int32, (d, d), 1)
    eye = (r_ix == c_ix).astype(f32)                          # [r, c]

    # A[r, c, p] = G[r, p] * G[c, p] * S[r, c] + beta * I[r, c]
    A = (G[:, None, :] * G[None, :, :]) * S[:, :, None] + beta * eye[:, :, None]
    # b[r, p] = G[r, p] * M[r, p]
    b = G * M

    # Batched (over p = lane axis) pivot-free Gauss-Jordan elimination.
    # A is SPD (PSD Gram + beta*I), so no pivoting is required. d is small
    # and static -> unrolled loop, static slices only.
    for k in range(d):
        rowk = A[k:k + 1, :, :]                               # [1, c, p]
        piv = A[k:k + 1, k:k + 1, :]                          # [1, 1, p]
        notk = (1.0 - eye[:, k:k + 1])[:, :, None]            # [r, 1, 1]
        fac = (A[:, k:k + 1, :] / piv) * notk                 # [r, 1, p]
        A = A - fac * rowk
        b = b - fac[:, 0, :] * b[k:k + 1, :]

    diag = jnp.sum(A * eye[:, :, None], axis=1)               # [r, p] = A[r, r, p]
    w = b / diag                                              # weights[j, p]

    # out[p, j2] = sum_k w[k, p] * X[k, j2]   (requires n == d, as in torch)
    out = lax.dot_general(w, X, cdims, preferred_element_type=f32)

    w_ref[...] = w[None].astype(w_ref.dtype)
    out_ref[...] = out[None, None].astype(out_ref.dtype)


def analytic_linear_locally_connected(x, dx, G, beta=BETA):
    n_ens, n, one, d = x.shape
    assert one == 1 and dx.shape == (n_ens, n, d, 1) and G.shape == (n_ens, d, d)
    # torch's forward (squeeze(0) + the final matmul) only type-checks here:
    assert n_ens == 1 and n == d

    X = x[:, :, 0, :].astype(jnp.float32)      # [n_ens, n, d]
    DX = dx[:, :, :, 0].astype(jnp.float32)    # [n_ens, n, d]
    Gf = G.astype(jnp.float32)

    out, weights = pl.pallas_call(
        functools.partial(_fused_kernel, beta=beta),
        out_shape=(jax.ShapeDtypeStruct((n_ens, 1, d, d), jnp.float32),
                   jax.ShapeDtypeStruct((n_ens, d, d), jnp.float32)),
        grid=(n_ens,),
        in_specs=[pl.BlockSpec((1, n, d), lambda e: (e, 0, 0)),
                  pl.BlockSpec((1, n, d), lambda e: (e, 0, 0)),
                  pl.BlockSpec((1, d, d), lambda e: (e, 0, 0))],
        out_specs=(pl.BlockSpec((1, 1, d, d), lambda e: (e, 0, 0, 0)),
                   pl.BlockSpec((1, d, d), lambda e: (e, 0, 0))),
        compiler_params=pltpu.CompilerParams(
            dimension_semantics=("parallel",)),
    )(X, DX, Gf)
    return out, weights


def _torch_reference(x, dx, G, beta=BETA):
    """Pure-JAX mirror of the PyTorch forward (for verification)."""
    n_ens, n, _, d = x.shape
    Gt = jnp.swapaxes(G, -2, -1)[:, None, :, :]              # [n_ens, 1, d, d]
    x_masked = Gt * x                                        # [n_ens, n, d, d]
    eye = beta * jnp.eye(d, dtype=x.dtype)[None]
    cols = []
    for p in range(d):
        Xp = x_masked[:, :, p, :]                            # [n_ens, n, d]
        XpT = jnp.swapaxes(Xp, -2, -1)
        A = XpT @ Xp + eye
        bb = XpT @ dx[:, :, p]                               # [n_ens, d, 1]
        cols.append(jnp.linalg.solve(A, bb))
    weights = jnp.concatenate(cols, axis=2)                  # [n_ens, d, d]
    Wt = jnp.swapaxes(weights[:, None], -2, -1)              # [n_ens, 1, d, d]
    X2 = x[:, :, 0, :][0]                                    # squeeze(-2).squeeze(0)
    out = Wt @ X2                                            # [n_ens, 1, d, d]
    return out, weights


if __name__ == "__main__":
    key = jax.random.PRNGKey(0)
    n_ens, d = 1, 8
    n = d  # the torch forward's final matmul requires n == d
    k1, k2, k3 = jax.random.split(key, 3)
    x = jax.random.normal(k1, (n_ens, n, 1, d), dtype=jnp.float32)
    dx = jax.random.normal(k2, (n_ens, n, d, 1), dtype=jnp.float32)
    G = (jax.random.uniform(k3, (n_ens, d, d)) < 0.5).astype(jnp.float32)

    out, weights = analytic_linear_locally_connected(x, dx, G)
    out = jax.block_until_ready(out)

    ref_out, ref_w = _torch_reference(x, dx, G)
    assert out.shape == (n_ens, 1, d, d) and weights.shape == (n_ens, d, d)
    # (reference uses pivoted LU, kernel uses pivot-free GJ on the SPD system;
    #  tolerances cover the f32 method difference)
    assert jnp.allclose(weights, ref_w, rtol=5e-3, atol=5e-3)
    assert jnp.allclose(out, ref_out, rtol=5e-3, atol=5e-3)
    print("KERNEL_OK")
</pallas_src>

<mosaic_0001>
module attributes {stable_mosaic.version = 11 : i64} {
  func.func @_fused_kernel(%arg0: i32, %arg1: memref<1x8x8xf32, #tpu.memory_space<vmem>>, %arg2: memref<1x8x8xf32, #tpu.memory_space<vmem>>, %arg3: memref<1x8x8xf32, #tpu.memory_space<vmem>>, %arg4: memref<1x1x8x8xf32, #tpu.memory_space<vmem>>, %arg5: memref<1x8x8xf32, #tpu.memory_space<vmem>>) attributes {dimension_semantics = [#tpu.dimension_semantics<parallel>], iteration_bounds = array<i64: 1>, scalar_prefetch = 0 : i64, scratch_operands = 0 : i64, tpu.core_type = #tpu.core_type<tc>, window_params = [{transform_indices = @transform_0, window_bounds = array<i64: 1, 8, 8>}, {transform_indices = @transform_1, window_bounds = array<i64: 1, 8, 8>}, {transform_indices = @transform_2, window_bounds = array<i64: 1, 8, 8>}, {transform_indices = @transform_3, window_bounds = array<i64: 1, 1, 8, 8>}, {transform_indices = @transform_4, window_bounds = array<i64: 1, 8, 8>}]} {
    %c0 = arith.constant 0 : index
    %c0_0 = arith.constant 0 : index
    %c0_1 = arith.constant 0 : index
    %0 = vector.load %arg1[%c0, %c0_0, %c0_1] : memref<1x8x8xf32, #tpu.memory_space<vmem>>, vector<1x8x8xf32>
    %1 = vector.shape_cast %0 : vector<1x8x8xf32> to vector<8x8xf32>
    %c0_2 = arith.constant 0 : index
    %c0_3 = arith.constant 0 : index
    %c0_4 = arith.constant 0 : index
    %2 = vector.load %arg2[%c0_2, %c0_3, %c0_4] : memref<1x8x8xf32, #tpu.memory_space<vmem>>, vector<1x8x8xf32>
    %3 = vector.shape_cast %2 : vector<1x8x8xf32> to vector<8x8xf32>
    %c0_5 = arith.constant 0 : index
    %c0_6 = arith.constant 0 : index
    %c0_7 = arith.constant 0 : index
    %4 = vector.load %arg3[%c0_5, %c0_6, %c0_7] : memref<1x8x8xf32, #tpu.memory_space<vmem>>, vector<1x8x8xf32>
    %5 = vector.shape_cast %4 : vector<1x8x8xf32> to vector<8x8xf32>
    %cst = arith.constant dense<0.000000e+00> : vector<8x8xf32>
    %6 = tpu.matmul %1, %1, %cst {dimension_numbers = #tpu.dot_dimension_numbers<[0], [0], [1], [1], [0, 1, 1, 1], [], []>} : vector<8x8xf32>, vector<8x8xf32>, vector<8x8xf32> -> vector<8x8xf32>
    %cst_8 = arith.constant dense<0.000000e+00> : vector<8x8xf32>
    %7 = tpu.matmul %1, %3, %cst_8 {dimension_numbers = #tpu.dot_dimension_numbers<[0], [0], [1], [1], [0, 1, 1, 1], [], []>} : vector<8x8xf32>, vector<8x8xf32>, vector<8x8xf32> -> vector<8x8xf32>
    %8 = tpu.iota {dimensions = array<i32: 0>} : vector<8x8xi32>
    %9 = tpu.iota {dimensions = array<i32: 1>} : vector<8x8xi32>
    %10 = arith.cmpi eq, %8, %9 : vector<8x8xi32>
    %11 = arith.extui %10 : vector<8x8xi1> to vector<8x8xi32>
    %12 = arith.sitofp %11 : vector<8x8xi32> to vector<8x8xf32>
    %13 = vector.shape_cast %5 : vector<8x8xf32> to vector<8x1x8xf32>
    %14 = vector.shape_cast %5 : vector<8x8xf32> to vector<1x8x8xf32>
    %15 = vector.broadcast %13 : vector<8x1x8xf32> to vector<8x8x8xf32>
    %16 = vector.broadcast %14 : vector<1x8x8xf32> to vector<8x8x8xf32>
    %17 = arith.mulf %15, %16 : vector<8x8x8xf32>
    %18 = vector.shape_cast %6 : vector<8x8xf32> to vector<8x8x1xf32>
    %19 = vector.broadcast %18 : vector<8x8x1xf32> to vector<8x8x8xf32>
    %20 = arith.mulf %17, %19 : vector<8x8x8xf32>
    %21 = vector.shape_cast %12 : vector<8x8xf32> to vector<8x8x1xf32>
    %cst_9 = arith.constant 0.00999999977 : f32
    %22 = vector.broadcast %cst_9 : f32 to vector<8x8x1xf32>
    %23 = arith.mulf %22, %21 : vector<8x8x1xf32>
    %24 = vector.broadcast %23 : vector<8x8x1xf32> to vector<8x8x8xf32>
    %25 = arith.addf %20, %24 : vector<8x8x8xf32>
    %26 = arith.mulf %5, %7 : vector<8x8xf32>
    %27 = vector.extract_strided_slice %25 {offsets = [0, 0, 0], sizes = [1, 8, 8], strides = [1, 1, 1]} : vector<8x8x8xf32> to vector<1x8x8xf32>
    %28 = vector.extract_strided_slice %25 {offsets = [0, 0, 0], sizes = [1, 1, 8], strides = [1, 1, 1]} : vector<8x8x8xf32> to vector<1x1x8xf32>
    %29 = vector.extract_strided_slice %12 {offsets = [0, 0], sizes = [8, 1], strides = [1, 1]} : vector<8x8xf32> to vector<8x1xf32>
    %cst_10 = arith.constant 1.000000e+00 : f32
    %30 = vector.broadcast %cst_10 : f32 to vector<8x1xf32>
    %31 = arith.subf %30, %29 : vector<8x1xf32>
    %32 = vector.shape_cast %31 : vector<8x1xf32> to vector<8x1x1xf32>
    %33 = vector.extract_strided_slice %25 {offsets = [0, 0, 0], sizes = [8, 1, 8], strides = [1, 1, 1]} : vector<8x8x8xf32> to vector<8x1x8xf32>
    %34 = vector.broadcast %28 : vector<1x1x8xf32> to vector<8x1x8xf32>
    %35 = arith.divf %33, %34 : vector<8x1x8xf32>
    %36 = vector.broadcast %32 : vector<8x1x1xf32> to vector<8x1x8xf32>
    %37 = arith.mulf %35, %36 : vector<8x1x8xf32>
    %38 = vector.broadcast %37 : vector<8x1x8xf32> to vector<8x8x8xf32>
    %39 = vector.broadcast %27 : vector<1x8x8xf32> to vector<8x8x8xf32>
    %40 = arith.mulf %38, %39 : vector<8x8x8xf32>
    %41 = arith.subf %25, %40 : vector<8x8x8xf32>
    %42 = vector.shape_cast %37 : vector<8x1x8xf32> to vector<8x8xf32>
    %43 = vector.extract_strided_slice %26 {offsets = [0, 0], sizes = [1, 8], strides = [1, 1]} : vector<8x8xf32> to vector<1x8xf32>
    %44 = vector.broadcast %43 : vector<1x8xf32> to vector<8x8xf32>
    %45 = arith.mulf %42, %44 : vector<8x8xf32>
    %46 = arith.subf %26, %45 : vector<8x8xf32>
    %47 = vector.extract_strided_slice %41 {offsets = [1, 0, 0], sizes = [1, 8, 8], strides = [1, 1, 1]} : vector<8x8x8xf32> to vector<1x8x8xf32>
    %48 = vector.extract_strided_slice %41 {offsets = [1, 1, 0], sizes = [1, 1, 8], strides = [1, 1, 1]} : vector<8x8x8xf32> to vector<1x1x8xf32>
    %49 = vector.extract_strided_slice %12 {offsets = [0, 1], sizes = [8, 1], strides = [1, 1]} : vector<8x8xf32> to vector<8x1xf32>
    %cst_11 = arith.constant 1.000000e+00 : f32
    %50 = vector.broadcast %cst_11 : f32 to vector<8x1xf32>
    %51 = arith.subf %50, %49 : vector<8x1xf32>
    %52 = vector.shape_cast %51 : vector<8x1xf32> to vector<8x1x1xf32>
    %53 = vector.extract_strided_slice %41 {offsets = [0, 1, 0], sizes = [8, 1, 8], strides = [1, 1, 1]} : vector<8x8x8xf32> to vector<8x1x8xf32>
    %54 = vector.broadcast %48 : vector<1x1x8xf32> to vector<8x1x8xf32>
    %55 = arith.divf %53, %54 : vector<8x1x8xf32>
    %56 = vector.broadcast %52 : vector<8x1x1xf32> to vector<8x1x8xf32>
    %57 = arith.mulf %55, %56 : vector<8x1x8xf32>
    %58 = vector.broadcast %57 : vector<8x1x8xf32> to vector<8x8x8xf32>
    %59 = vector.broadcast %47 : vector<1x8x8xf32> to vector<8x8x8xf32>
    %60 = arith.mulf %58, %59 : vector<8x8x8xf32>
    %61 = arith.subf %41, %60 : vector<8x8x8xf32>
    %62 = vector.shape_cast %57 : vector<8x1x8xf32> to vector<8x8xf32>
    %63 = vector.extract_strided_slice %46 {offsets = [1, 0], sizes = [1, 8], strides = [1, 1]} : vector<8x8xf32> to vector<1x8xf32>
    %64 = vector.broadcast %63 : vector<1x8xf32> to vector<8x8xf32>
    %65 = arith.mulf %62, %64 : vector<8x8xf32>
    %66 = arith.subf %46, %65 : vector<8x8xf32>
    %67 = vector.extract_strided_slice %61 {offsets = [2, 0, 0], sizes = [1, 8, 8], strides = [1, 1, 1]} : vector<8x8x8xf32> to vector<1x8x8xf32>
    %68 = vector.extract_strided_slice %61 {offsets = [2, 2, 0], sizes = [1, 1, 8], strides = [1, 1, 1]} : vector<8x8x8xf32> to vector<1x1x8xf32>
    %69 = vector.extract_strided_slice %12 {offsets = [0, 2], sizes = [8, 1], strides = [1, 1]} : vector<8x8xf32> to vector<8x1xf32>
    %cst_12 = arith.constant 1.000000e+00 : f32
    %70 = vector.broadcast %cst_12 : f32 to vector<8x1xf32>
    %71 = arith.subf %70, %69 : vector<8x1xf32>
    %72 = vector.shape_cast %71 : vector<8x1xf32> to vector<8x1x1xf32>
    %73 = vector.extract_strided_slice %61 {offsets = [0, 2, 0], sizes = [8, 1, 8], strides = [1, 1, 1]} : vector<8x8x8xf32> to vector<8x1x8xf32>
    %74 = vector.broadcast %68 : vector<1x1x8xf32> to vector<8x1x8xf32>
    %75 = arith.divf %73, %74 : vector<8x1x8xf32>
    %76 = vector.broadcast %72 : vector<8x1x1xf32> to vector<8x1x8xf32>
    %77 = arith.mulf %75, %76 : vector<8x1x8xf32>
    %78 = vector.broadcast %77 : vector<8x1x8xf32> to vector<8x8x8xf32>
    %79 = vector.broadcast %67 : vector<1x8x8xf32> to vector<8x8x8xf32>
    %80 = arith.mulf %78, %79 : vector<8x8x8xf32>
    %81 = arith.subf %61, %80 : vector<8x8x8xf32>
    %82 = vector.shape_cast %77 : vector<8x1x8xf32> to vector<8x8xf32>
    %83 = vector.extract_strided_slice %66 {offsets = [2, 0], sizes = [1, 8], strides = [1, 1]} : vector<8x8xf32> to vector<1x8xf32>
    %84 = vector.broadcast %83 : vector<1x8xf32> to vector<8x8xf32>
    %85 = arith.mulf %82, %84 : vector<8x8xf32>
    %86 = arith.subf %66, %85 : vector<8x8xf32>
    %87 = vector.extract_strided_slice %81 {offsets = [3, 0, 0], sizes = [1, 8, 8], strides = [1, 1, 1]} : vector<8x8x8xf32> to vector<1x8x8xf32>
    %88 = vector.extract_strided_slice %81 {offsets = [3, 3, 0], sizes = [1, 1, 8], strides = [1, 1, 1]} : vector<8x8x8xf32> to vector<1x1x8xf32>
    %89 = vector.extract_strided_slice %12 {offsets = [0, 3], sizes = [8, 1], strides = [1, 1]} : vector<8x8xf32> to vector<8x1xf32>
    %cst_13 = arith.constant 1.000000e+00 : f32
    %90 = vector.broadcast %cst_13 : f32 to vector<8x1xf32>
    %91 = arith.subf %90, %89 : vector<8x1xf32>
    %92 = vector.shape_cast %91 : vector<8x1xf32> to vector<8x1x1xf32>
    %93 = vector.extract_strided_slice %81 {offsets = [0, 3, 0], sizes = [8, 1, 8], strides = [1, 1, 1]} : vector<8x8x8xf32> to vector<8x1x8xf32>
    %94 = vector.broadcast %88 : vector<1x1x8xf32> to vector<8x1x8xf32>
    %95 = arith.divf %93, %94 : vector<8x1x8xf32>
    %96 = vector.broadcast %92 : vector<8x1x1xf32> to vector<8x1x8xf32>
    %97 = arith.mulf %95, %96 : vector<8x1x8xf32>
    %98 = vector.broadcast %97 : vector<8x1x8xf32> to vector<8x8x8xf32>
    %99 = vector.broadcast %87 : vector<1x8x8xf32> to vector<8x8x8xf32>
    %100 = arith.mulf %98, %99 : vector<8x8x8xf32>
    %101 = arith.subf %81, %100 : vector<8x8x8xf32>
    %102 = vector.shape_cast %97 : vector<8x1x8xf32> to vector<8x8xf32>
    %103 = vector.extract_strided_slice %86 {offsets = [3, 0], sizes = [1, 8], strides = [1, 1]} : vector<8x8xf32> to vector<1x8xf32>
    %104 = vector.broadcast %103 : vector<1x8xf32> to vector<8x8xf32>
    %105 = arith.mulf %102, %104 : vector<8x8xf32>
    %106 = arith.subf %86, %105 : vector<8x8xf32>
    %107 = vector.extract_strided_slice %101 {offsets = [4, 0, 0], sizes = [1, 8, 8], strides = [1, 1, 1]} : vector<8x8x8xf32> to vector<1x8x8xf32>
    %108 = vector.extract_strided_slice %101 {offsets = [4, 4, 0], sizes = [1, 1, 8], strides = [1, 1, 1]} : vector<8x8x8xf32> to vector<1x1x8xf32>
    %109 = vector.extract_strided_slice %12 {offsets = [0, 4], sizes = [8, 1], strides = [1, 1]} : vector<8x8xf32> to vector<8x1xf32>
    %cst_14 = arith.constant 1.000000e+00 : f32
    %110 = vector.broadcast %cst_14 : f32 to vector<8x1xf32>
    %111 = arith.subf %110, %109 : vector<8x1xf32>
    %112 = vector.shape_cast %111 : vector<8x1xf32> to vector<8x1x1xf32>
    %113 = vector.extract_strided_slice %101 {offsets = [0, 4, 0], sizes = [8, 1, 8], strides = [1, 1, 1]} : vector<8x8x8xf32> to vector<8x1x8xf32>
    %114 = vector.broadcast %108 : vector<1x1x8xf32> to vector<8x1x8xf32>
    %115 = arith.divf %113, %114 : vector<8x1x8xf32>
    %116 = vector.broadcast %112 : vector<8x1x1xf32> to vector<8x1x8xf32>
    %117 = arith.mulf %115, %116 : vector<8x1x8xf32>
    %118 = vector.broadcast %117 : vector<8x1x8xf32> to vector<8x8x8xf32>
    %119 = vector.broadcast %107 : vector<1x8x8xf32> to vector<8x8x8xf32>
    %120 = arith.mulf %118, %119 : vector<8x8x8xf32>
    %121 = arith.subf %101, %120 : vector<8x8x8xf32>
    %122 = vector.shape_cast %117 : vector<8x1x8xf32> to vector<8x8xf32>
    %123 = vector.extract_strided_slice %106 {offsets = [4, 0], sizes = [1, 8], strides = [1, 1]} : vector<8x8xf32> to vector<1x8xf32>
    %124 = vector.broadcast %123 : vector<1x8xf32> to vector<8x8xf32>
    %125 = arith.mulf %122, %124 : vector<8x8xf32>
    %126 = arith.subf %106, %125 : vector<8x8xf32>
    %127 = vector.extract_strided_slice %121 {offsets = [5, 0, 0], sizes = [1, 8, 8], strides = [1, 1, 1]} : vector<8x8x8xf32> to vector<1x8x8xf32>
    %128 = vector.extract_strided_slice %121 {offsets = [5, 5, 0], sizes = [1, 1, 8], strides = [1, 1, 1]} : vector<8x8x8xf32> to vector<1x1x8xf32>
    %129 = vector.extract_strided_slice %12 {offsets = [0, 5], sizes = [8, 1], strides = [1, 1]} : vector<8x8xf32> to vector<8x1xf32>
    %cst_15 = arith.constant 1.000000e+00 : f32
    %130 = vector.broadcast %cst_15 : f32 to vector<8x1xf32>
    %131 = arith.subf %130, %129 : vector<8x1xf32>
    %132 = vector.shape_cast %131 : vector<8x1xf32> to vector<8x1x1xf32>
    %133 = vector.extract_strided_slice %121 {offsets = [0, 5, 0], sizes = [8, 1, 8], strides = [1, 1, 1]} : vector<8x8x8xf32> to vector<8x1x8xf32>
    %134 = vector.broadcast %128 : vector<1x1x8xf32> to vector<8x1x8xf32>
    %135 = arith.divf %133, %134 : vector<8x1x8xf32>
    %136 = vector.broadcast %132 : vector<8x1x1xf32> to vector<8x1x8xf32>
    %137 = arith.mulf %135, %136 : vector<8x1x8xf32>
    %138 = vector.broadcast %137 : vector<8x1x8xf32> to vector<8x8x8xf32>
    %139 = vector.broadcast %127 : vector<1x8x8xf32> to vector<8x8x8xf32>
    %140 = arith.mulf %138, %139 : vector<8x8x8xf32>
    %141 = arith.subf %121, %140 : vector<8x8x8xf32>
    %142 = vector.shape_cast %137 : vector<8x1x8xf32> to vector<8x8xf32>
    %143 = vector.extract_strided_slice %126 {offsets = [5, 0], sizes = [1, 8], strides = [1, 1]} : vector<8x8xf32> to vector<1x8xf32>
    %144 = vector.broadcast %143 : vector<1x8xf32> to vector<8x8xf32>
    %145 = arith.mulf %142, %144 : vector<8x8xf32>
    %146 = arith.subf %126, %145 : vector<8x8xf32>
    %147 = vector.extract_strided_slice %141 {offsets = [6, 0, 0], sizes = [1, 8, 8], strides = [1, 1, 1]} : vector<8x8x8xf32> to vector<1x8x8xf32>
    %148 = vector.extract_strided_slice %141 {offsets = [6, 6, 0], sizes = [1, 1, 8], strides = [1, 1, 1]} : vector<8x8x8xf32> to vector<1x1x8xf32>
    %149 = vector.extract_strided_slice %12 {offsets = [0, 6], sizes = [8, 1], strides = [1, 1]} : vector<8x8xf32> to vector<8x1xf32>
    %cst_16 = arith.constant 1.000000e+00 : f32
    %150 = vector.broadcast %cst_16 : f32 to vector<8x1xf32>
    %151 = arith.subf %150, %149 : vector<8x1xf32>
    %152 = vector.shape_cast %151 : vector<8x1xf32> to vector<8x1x1xf32>
    %153 = vector.extract_strided_slice %141 {offsets = [0, 6, 0], sizes = [8, 1, 8], strides = [1, 1, 1]} : vector<8x8x8xf32> to vector<8x1x8xf32>
    %154 = vector.broadcast %148 : vector<1x1x8xf32> to vector<8x1x8xf32>
    %155 = arith.divf %153, %154 : vector<8x1x8xf32>
    %156 = vector.broadcast %152 : vector<8x1x1xf32> to vector<8x1x8xf32>
    %157 = arith.mulf %155, %156 : vector<8x1x8xf32>
    %158 = vector.broadcast %157 : vector<8x1x8xf32> to vector<8x8x8xf32>
    %159 = vector.broadcast %147 : vector<1x8x8xf32> to vector<8x8x8xf32>
    %160 = arith.mulf %158, %159 : vector<8x8x8xf32>
    %161 = arith.subf %141, %160 : vector<8x8x8xf32>
    %162 = vector.shape_cast %157 : vector<8x1x8xf32> to vector<8x8xf32>
    %163 = vector.extract_strided_slice %146 {offsets = [6, 0], sizes = [1, 8], strides = [1, 1]} : vector<8x8xf32> to vector<1x8xf32>
    %164 = vector.broadcast %163 : vector<1x8xf32> to vector<8x8xf32>
    %165 = arith.mulf %162, %164 : vector<8x8xf32>
    %166 = arith.subf %146, %165 : vector<8x8xf32>
    %167 = vector.extract_strided_slice %161 {offsets = [7, 0, 0], sizes = [1, 8, 8], strides = [1, 1, 1]} : vector<8x8x8xf32> to vector<1x8x8xf32>
    %168 = vector.extract_strided_slice %161 {offsets = [7, 7, 0], sizes = [1, 1, 8], strides = [1, 1, 1]} : vector<8x8x8xf32> to vector<1x1x8xf32>
    %169 = vector.extract_strided_slice %12 {offsets = [0, 7], sizes = [8, 1], strides = [1, 1]} : vector<8x8xf32> to vector<8x1xf32>
    %cst_17 = arith.constant 1.000000e+00 : f32
    %170 = vector.broadcast %cst_17 : f32 to vector<8x1xf32>
    %171 = arith.subf %170, %169 : vector<8x1xf32>
    %172 = vector.shape_cast %171 : vector<8x1xf32> to vector<8x1x1xf32>
    %173 = vector.extract_strided_slice %161 {offsets = [0, 7, 0], sizes = [8, 1, 8], strides = [1, 1, 1]} : vector<8x8x8xf32> to vector<8x1x8xf32>
    %174 = vector.broadcast %168 : vector<1x1x8xf32> to vector<8x1x8xf32>
    %175 = arith.divf %173, %174 : vector<8x1x8xf32>
    %176 = vector.broadcast %172 : vector<8x1x1xf32> to vector<8x1x8xf32>
    %177 = arith.mulf %175, %176 : vector<8x1x8xf32>
    %178 = vector.broadcast %177 : vector<8x1x8xf32> to vector<8x8x8xf32>
    %179 = vector.broadcast %167 : vector<1x8x8xf32> to vector<8x8x8xf32>
    %180 = arith.mulf %178, %179 : vector<8x8x8xf32>
    %181 = arith.subf %161, %180 : vector<8x8x8xf32>
    %182 = vector.shape_cast %177 : vector<8x1x8xf32> to vector<8x8xf32>
    %183 = vector.extract_strided_slice %166 {offsets = [7, 0], sizes = [1, 8], strides = [1, 1]} : vector<8x8xf32> to vector<1x8xf32>
    %184 = vector.broadcast %183 : vector<1x8xf32> to vector<8x8xf32>
    %185 = arith.mulf %182, %184 : vector<8x8xf32>
    %186 = arith.subf %166, %185 : vector<8x8xf32>
    %187 = vector.shape_cast %12 : vector<8x8xf32> to vector<8x8x1xf32>
    %188 = vector.broadcast %187 : vector<8x8x1xf32> to vector<8x8x8xf32>
    %189 = arith.mulf %181, %188 : vector<8x8x8xf32>
    %cst_18 = arith.constant dense<0.000000e+00> : vector<8x8xf32>
    %190 = vector.multi_reduction <add>, %189, %cst_18 [1] : vector<8x8x8xf32> to vector<8x8xf32>
    %191 = arith.divf %186, %190 : vector<8x8xf32>
    %cst_19 = arith.constant dense<0.000000e+00> : vector<8x8xf32>
    %192 = tpu.matmul %191, %1, %cst_19 {dimension_numbers = #tpu.dot_dimension_numbers<[0], [0], [1], [1], [0, 1, 1, 1], [], []>} : vector<8x8xf32>, vector<8x8xf32>, vector<8x8xf32> -> vector<8x8xf32>
    %193 = vector.shape_cast %191 : vector<8x8xf32> to vector<1x8x8xf32>
    %c0_20 = arith.constant 0 : index
    %c0_21 = arith.constant 0 : index
    %c0_22 = arith.constant 0 : index
    %194 = vector.load %arg5[%c0_20, %c0_21, %c0_22] : memref<1x8x8xf32, #tpu.memory_space<vmem>>, vector<1x8x8xf32>
    tpu.vector_store %arg5[%c0_20, %c0_21, %c0_22], %193 {strides = array<i32>} : memref<1x8x8xf32, #tpu.memory_space<vmem>>, vector<1x8x8xf32>,
    %195 = vector.shape_cast %192 : vector<8x8xf32> to vector<1x1x8x8xf32>
    %c0_23 = arith.constant 0 : index
    %c0_24 = arith.constant 0 : index
    %c0_25 = arith.constant 0 : index
    %c0_26 = arith.constant 0 : index
    %196 = vector.load %arg4[%c0_23, %c0_24, %c0_25, %c0_26] : memref<1x1x8x8xf32, #tpu.memory_space<vmem>>, vector<1x1x8x8xf32>
    tpu.vector_store %arg4[%c0_23, %c0_24, %c0_25, %c0_26], %195 {strides = array<i32>} : memref<1x1x8x8xf32, #tpu.memory_space<vmem>>, vector<1x1x8x8xf32>,
    return
  }
  func.func @transform_0(%arg0: i32) -> (i32, i32, i32) {
    %c0_i32 = arith.constant 0 : i32
    %c0_i32_0 = arith.constant 0 : i32
    %c0_i32_1 = arith.constant 0 : i32
    return %arg0, %c0_i32, %c0_i32_0 : i32, i32, i32
  }
  func.func @transform_1(%arg0: i32) -> (i32, i32, i32) {
    %c0_i32 = arith.constant 0 : i32
    %c0_i32_0 = arith.constant 0 : i32
    %c0_i32_1 = arith.constant 0 : i32
    return %arg0, %c0_i32, %c0_i32_0 : i32, i32, i32
  }
  func.func @transform_2(%arg0: i32) -> (i32, i32, i32) {
    %c0_i32 = arith.constant 0 : i32
    %c0_i32_0 = arith.constant 0 : i32
    %c0_i32_1 = arith.constant 0 : i32
    return %arg0, %c0_i32, %c0_i32_0 : i32, i32, i32
  }
  func.func @transform_3(%arg0: i32) -> (i32, i32, i32, i32) {
    %c0_i32 = arith.constant 0 : i32
    %c0_i32_0 = arith.constant 0 : i32
    %c0_i32_1 = arith.constant 0 : i32
    %c0_i32_2 = arith.constant 0 : i32
    return %arg0, %c0_i32, %c0_i32_0, %c0_i32_1 : i32, i32, i32, i32
  }
  func.func @transform_4(%arg0: i32) -> (i32, i32, i32) {
    %c0_i32 = arith.constant 0 : i32
    %c0_i32_0 = arith.constant 0 : i32
    %c0_i32_1 = arith.constant 0 : i32
    return %arg0, %c0_i32, %c0_i32_0 : i32, i32, i32
  }
}

</mosaic_0001>

<llo_original>
// kernel: tpu_custom_call.1
$region0: #{tpu_custom_call.1}
  #allocation0 [shape = 'u32[]', space=smem, size = 0x4, offset = 0x4, fixed_abs, tag = 'smem constant byte address 0x4 - core index']
  #allocation1 [shape = 'u32[144,128]{1,0:T(1,128)}', space=vmem, size = 0x12000, scoped, tag = 'internal scratch']
  %s0 = inlined_call_operand.hbm [shape: f32[1,8,8], index: 0, kind: input, shape index: {}]
  %s1 = inlined_call_operand.hbm [shape: f32[1,8,8], index: 1, kind: input, shape index: {}]
  %s2 = inlined_call_operand.hbm [shape: f32[1,8,8], index: 2, kind: input, shape index: {}]
  %s3 = inlined_call_operand.hbm [shape: f32[1,1,8,8], index: 3, kind: output, shape index: {0}]
  %s4 = inlined_call_operand.hbm [shape: f32[1,8,8], index: 4, kind: output, shape index: {1}]
  %5 = xla_tuple %s3, %s4
  %s6 = sld [smem:[#allocation0]]
  $region42: #{tpu_custom_call.1} parent=0
    _
  %s8 = ssub.s32 1, %s6
  %s9 = scalar_select 0, %s8, %s6
  $region1: #{tpu_custom_call.1} parent=0
    #allocation2 [shape = 'u8[4096]{0}', space=vmem, size = 0x1000, scoped, tag = 'input window, operand 0, single buffered']
    #allocation3 [shape = 's32[1]{0}', space=sflag, size = 0x4, scoped, tag = 'scoped memory for tpu_custom_call.1']
    #allocation4 [shape = 's32[1]{0}', space=sflag, size = 0x4, scoped, tag = 'scoped memory for tpu_custom_call.1']
    #allocation5 [shape = 'u8[4096]{0}', space=vmem, size = 0x1000, scoped, tag = 'input window, operand 1, single buffered']
    #allocation6 [shape = 's32[1]{0}', space=sflag, size = 0x4, scoped, tag = 'scoped memory for tpu_custom_call.1']
    #allocation7 [shape = 'u8[4096]{0}', space=vmem, size = 0x1000, scoped, tag = 'input window, operand 2, single buffered']
    #allocation8 [shape = 'u8[4096]{0}', space=vmem, size = 0x1000, scoped, tag = 'output window, operand 0, single buffered']
    #allocation9 [shape = 'u8[4096]{0}', space=vmem, size = 0x1000, scoped, tag = 'output window, operand 1, single buffered']
    #allocation10 [shape = 's32[1]{0}', space=sflag, size = 0x4, scoped, tag = 'scoped memory for tpu_custom_call.1']
    %10 = vsyncpa [#allocation3], 0
    %11 = vsyncpa [#allocation6], 0
    %12 = vsyncpa [#allocation4], 0
    %13 = vsyncpa [#allocation10], 0
    // Predicated region
    $region2: #{tpu_custom_call.1} parent=1 // pred_check
      _
    $region3: #{tpu_custom_call.1} parent=1 // pred_check_branch
      %15 = sbr.rel (0) target = $region5
    $region4: #{tpu_custom_call.1} parent=1 // pred_region
      %s17 = ssub.s32 128, 128
      %18 = vsyncadd [#allocation3], %s17
      %s20 = sshll.u32 [#allocation2], 4
      %s21 = int_to_ptr.vmem [resolvable:$true] %s20
      %23 = dma.hbm_to_vmem [thread:$0]  %s0, 128, %s21, [#allocation3]
    $region5: #{tpu_custom_call.1} parent=1 // pred_fallthru
      _
    // Predicated region
    $region6: #{tpu_custom_call.1} parent=1 // pred_check
      _
    $region7: #{tpu_custom_call.1} parent=1 // pred_check_branch
      %25 = sbr.rel (0) target = $region9
    $region8: #{tpu_custom_call.1} parent=1 // pred_region
      %s27 = ssub.s32 128, 128
      %28 = vsyncadd [#allocation6], %s27
      %s30 = sshll.u32 [#allocation5], 4
      %s31 = int_to_ptr.vmem [resolvable:$true] %s30
      %33 = dma.hbm_to_vmem [thread:$0]  %s1, 128, %s31, [#allocation6]
    $region9: #{tpu_custom_call.1} parent=1 // pred_fallthru
      _
    // Predicated region
    $region10: #{tpu_custom_call.1} parent=1 // pred_check
      _
    $region11: #{tpu_custom_call.1} parent=1 // pred_check_branch
      %35 = sbr.rel (0) target = $region13
    $region12: #{tpu_custom_call.1} parent=1 // pred_region
      %s37 = ssub.s32 128, 128
      %38 = vsyncadd [#allocation6], %s37
      %s40 = sshll.u32 [#allocation7], 4
      %s41 = int_to_ptr.vmem [resolvable:$true] %s40
      %43 = dma.hbm_to_vmem [thread:$0]  %s2, 128, %s41, [#allocation6]
    $region13: #{tpu_custom_call.1} parent=1 // pred_fallthru
      _
    // Predicated region
    $region14: #{tpu_custom_call.1} parent=1 // pred_check
      _
    $region15: #{tpu_custom_call.1} parent=1 // pred_check_branch
      %45 = sbr.rel (0) target = $region17
    $region16: #{tpu_custom_call.1} parent=1 // pred_region
      %46 = dma.done [#allocation3], 128
    $region17: #{tpu_custom_call.1} parent=1 // pred_fallthru
      _
    // Predicated region
    $region18: #{tpu_custom_call.1} parent=1 // pred_check
      _
    $region19: #{tpu_custom_call.1} parent=1 // pred_check_branch
      %48 = sbr.rel (0) target = $region21
    $region20: #{tpu_custom_call.1} parent=1 // pred_region
      %49 = dma.done [#allocation6], 128
    $region21: #{tpu_custom_call.1} parent=1 // pred_fallthru
      _
    // Predicated region
    $region22: #{tpu_custom_call.1} parent=1 // pred_check
      _
    $region23: #{tpu_custom_call.1} parent=1 // pred_check_branch
      %51 = sbr.rel (0) target = $region25
    $region24: #{tpu_custom_call.1} parent=1 // pred_region
      %52 = dma.done [#allocation6], 128
    $region25: #{tpu_custom_call.1} parent=1 // pred_fallthru
      _
    %v53 = vld [vmem:[#allocation2] sm:$0xff]
    %v54 = vld [vmem:[#allocation5] sm:$0xff]
    %v55 = vld [vmem:[#allocation7] sm:$0xff]
    %56 = vxpose.xlu0.b32.start [1/16] %v53, 128
    %57 = vxpose.xlu0.b32.cont [2/16] 0.0, 128
    %58 = vxpose.xlu0.b32.cont [3/16] 0.0, 128
    %59 = vxpose.xlu0.b32.cont [4/16] 0.0, 128
    %60 = vxpose.xlu0.b32.cont [5/16] 0.0, 128
    %61 = vxpose.xlu0.b32.cont [6/16] 0.0, 128
    %62 = vxpose.xlu0.b32.cont [7/16] 0.0, 128
    %63 = vxpose.xlu0.b32.cont [8/16] 0.0, 128
    %64 = vxpose.xlu0.b32.cont [9/16] 0.0, 128
    %65 = vxpose.xlu0.b32.cont [10/16] 0.0, 128
    %66 = vxpose.xlu0.b32.cont [11/16] 0.0, 128
    %67 = vxpose.xlu0.b32.cont [12/16] 0.0, 128
    %68 = vxpose.xlu0.b32.cont [13/16] 0.0, 128
    %69 = vxpose.xlu0.b32.cont [14/16] 0.0, 128
    %70 = vxpose.xlu0.b32.cont [15/16] 0.0, 128
    %71 = vxpose.xlu0.b32.end [16/16] 0.0, 128
    %v72 = vpop.trf.xlu0
    %v73 = vpop.trf.xlu0
    %v74 = vpop.trf.xlu0
    %v75 = vpop.trf.xlu0
    %v76 = vpop.trf.xlu0
    %v77 = vpop.trf.xlu0
    %v78 = vpop.trf.xlu0
    %v79 = vpop.trf.xlu0
    %v80 = vpop.trf.xlu0
    %v81 = vpop.trf.xlu0
    %v82 = vpop.trf.xlu0
    %v83 = vpop.trf.xlu0
    %v84 = vpop.trf.xlu0
    %v85 = vpop.trf.xlu0
    %v86 = vpop.trf.xlu0
    %v87 = vpop.trf.xlu0
    %vm88 = vcmask 64512
    %v90 = vsel %vm88, %v72, 0
    %92 = vmatprep.subr.mxu0 0.0
    %93 = vmatpush1.msra.mxu0 %v53
    %94 = vmatprep.subr.mxu0 0.0
    %95 = vmatpush1.msra.mxu0 0.0
    %96 = vmatprep.subr.mxu0 0.0
    %97 = vmatpush1.msra.mxu0 0.0
    %98 = vmatprep.subr.mxu0 0.0
    %99 = vmatpush1.msra.mxu0 0.0
    %100 = vmatprep.subr.mxu0 0.0
    %101 = vmatpush1.msra.mxu0 0.0
    %102 = vmatprep.subr.mxu0 0.0
    %103 = vmatpush1.msra.mxu0 0.0
    %104 = vmatprep.subr.mxu0 0.0
    %105 = vmatpush1.msra.mxu0 0.0
    %106 = vmatprep.subr.mxu0 0.0
    %107 = vmatpush1.msra.mxu0 0.0
    %108 = vmatprep.subr.mxu0 0.0
    %109 = vmatpush1.msra.mxu0 0.0
    %110 = vmatprep.subr.mxu0 0.0
    %111 = vmatpush1.msra.mxu0 0.0
    %112 = vmatprep.subr.mxu0 0.0
    %113 = vmatpush1.msra.mxu0 0.0
    %114 = vmatprep.subr.mxu0 0.0
    %115 = vmatpush1.msra.mxu0 0.0
    %116 = vmatprep.subr.mxu0 0.0
    %117 = vmatpush1.msra.mxu0 0.0
    %118 = vmatprep.subr.mxu0 0.0
    %119 = vmatpush1.msra.mxu0 0.0
    %120 = vmatprep.subr.mxu0 0.0
    %121 = vmatpush1.msra.mxu0 0.0
    %122 = vmatprep.subr.mxu0 0.0
    %123 = vmatpush1.msra.mxu0 0.0
    %124 = vmatprep.subr.mxu0 0.0
    %125 = vmatpush1.msra.mxu0 0.0
    %126 = vmatprep.subr.mxu0 0.0
    %127 = vmatpush1.msra.mxu0 0.0
    %128 = vmatprep.subr.mxu0 0.0
    %129 = vmatpush1.msra.mxu0 0.0
    %130 = vmatprep.subr.mxu0 0.0
    %131 = vmatpush1.msra.mxu0 0.0
    %132 = vmatprep.subr.mxu0 0.0
    %133 = vmatpush1.msra.mxu0 0.0
    %134 = vmatprep.subr.mxu0 0.0
    %135 = vmatpush1.msra.mxu0 0.0
    %136 = vmatprep.subr.mxu0 0.0
    %137 = vmatpush1.msra.mxu0 0.0
    %138 = vmatprep.subr.mxu0 0.0
    %139 = vmatpush1.msra.mxu0 0.0
    %140 = vmatprep.subr.mxu0 0.0
    %141 = vmatpush1.msra.mxu0 0.0
    %142 = vmatprep.subr.mxu0 0.0
    %143 = vmatpush1.msra.mxu0 0.0
    %144 = vmatprep.subr.mxu0 0.0
    %145 = vmatpush1.msra.mxu0 0.0
    %146 = vmatprep.subr.mxu0 0.0
    %147 = vmatpush1.msra.mxu0 0.0
    %148 = vmatprep.subr.mxu0 0.0
    %149 = vmatpush1.msra.mxu0 0.0
    %150 = vmatprep.subr.mxu0 0.0
    %151 = vmatpush1.msra.mxu0 0.0
    %152 = vmatprep.subr.mxu0 0.0
    %153 = vmatpush1.msra.mxu0 0.0
    %154 = vmatprep.subr.mxu0 0.0
    %155 = vmatpush1.msra.mxu0 0.0
    %156 = vmatprep.mubr.f32.mxu0 0.0
    %157 = vmatmul.mubr.f32.gmra.mrb[0].mxu0 %v90
    %v158 = vpop.f32.mrb[0].mxu0
    %v159 = vadd.f32 0.0, %v158
    %v160 = vpop.f32.mrb[0].mxu0
    %161 = vdwg.mxu0
    %162 = vmatprep.subr.mxu0 0.0
    %163 = vmatpush1.msra.mxu0 %v54
    %164 = vmatprep.subr.mxu0 0.0
    %165 = vmatpush1.msra.mxu0 0.0
    %166 = vmatprep.subr.mxu0 0.0
    %167 = vmatpush1.msra.mxu0 0.0
    %168 = vmatprep.subr.mxu0 0.0
    %169 = vmatpush1.msra.mxu0 0.0
    %170 = vmatprep.subr.mxu0 0.0
    %171 = vmatpush1.msra.mxu0 0.0
    %172 = vmatprep.subr.mxu0 0.0
    %173 = vmatpush1.msra.mxu0 0.0
    %174 = vmatprep.subr.mxu0 0.0
    %175 = vmatpush1.msra.mxu0 0.0
    %176 = vmatprep.subr.mxu0 0.0
    %177 = vmatpush1.msra.mxu0 0.0
    %178 = vmatprep.subr.mxu0 0.0
    %179 = vmatpush1.msra.mxu0 0.0
    %180 = vmatprep.subr.mxu0 0.0
    %181 = vmatpush1.msra.mxu0 0.0
    %182 = vmatprep.subr.mxu0 0.0
    %183 = vmatpush1.msra.mxu0 0.0
    %184 = vmatprep.subr.mxu0 0.0
    %185 = vmatpush1.msra.mxu0 0.0
    %186 = vmatprep.subr.mxu0 0.0
    %187 = vmatpush1.msra.mxu0 0.0
    %188 = vmatprep.subr.mxu0 0.0
    %189 = vmatpush1.msra.mxu0 0.0
    %190 = vmatprep.subr.mxu0 0.0
    %191 = vmatpush1.msra.mxu0 0.0
    %192 = vmatprep.subr.mxu0 0.0
    %193 = vmatpush1.msra.mxu0 0.0
    %194 = vmatprep.subr.mxu0 0.0
    %195 = vmatpush1.msra.mxu0 0.0
    %196 = vmatprep.subr.mxu0 0.0
    %197 = vmatpush1.msra.mxu0 0.0
    %198 = vmatprep.subr.mxu0 0.0
    %199 = vmatpush1.msra.mxu0 0.0
    %200 = vmatprep.subr.mxu0 0.0
    %201 = vmatpush1.msra.mxu0 0.0
    %202 = vmatprep.subr.mxu0 0.0
    %203 = vmatpush1.msra.mxu0 0.0
    %204 = vmatprep.subr.mxu0 0.0
    %205 = vmatpush1.msra.mxu0 0.0
    %206 = vmatprep.subr.mxu0 0.0
    %207 = vmatpush1.msra.mxu0 0.0
    %208 = vmatprep.subr.mxu0 0.0
    %209 = vmatpush1.msra.mxu0 0.0
    %210 = vmatprep.subr.mxu0 0.0
    %211 = vmatpush1.msra.mxu0 0.0
    %212 = vmatprep.subr.mxu0 0.0
    %213 = vmatpush1.msra.mxu0 0.0
    %214 = vmatprep.subr.mxu0 0.0
    %215 = vmatpush1.msra.mxu0 0.0
    %216 = vmatprep.subr.mxu0 0.0
    %217 = vmatpush1.msra.mxu0 0.0
    %218 = vmatprep.subr.mxu0 0.0
    %219 = vmatpush1.msra.mxu0 0.0
    %220 = vmatprep.subr.mxu0 0.0
    %221 = vmatpush1.msra.mxu0 0.0
    %222 = vmatprep.subr.mxu0 0.0
    %223 = vmatpush1.msra.mxu0 0.0
    %224 = vmatprep.subr.mxu0 0.0
    %225 = vmatpush1.msra.mxu0 0.0
    %226 = vmatprep.mubr.f32.mxu0 0.0
    %227 = vmatmul.mubr.f32.gmra.mrb[0].mxu0 %v90
    %v228 = vpop.f32.mrb[0].mxu0
    %v229 = vadd.f32 0.0, %v228
    %v230 = vpop.f32.mrb[0].mxu0
    %231 = vdwg.mxu0
    %v232 = vlaneseq
    %v233 = vshrl.u32 %v232, 7
    %v234 = vlaneseq
    %v235 = vand.u32 %v234, 127
    %vm236 = vcmp.eq.s32.totalorder %v233, %v235
    %v237 = vsel %vm236, 1, 0
    %v238 = vcvt.s32.f32 %v237
    %v240 = vcombine.high %v55, %v55
    %v242 = vunpack.c.l.s4 1966171168
    %v243 = vunpack.c.0.s8 %v242
    %v244 = vlaneseq
    %v245 = vshrl.u32 %v244, 7
    %v246 = vsub.s32 %v243, %v245
    %v247 = vrot.slane %v55, %v246
    %v249 = vunpack.c.l.s4 1966171168
    %v250 = vunpack.c.0.s8 %v249
    %v251 = vlaneseq
    %v252 = vshrl.u32 %v251, 7
    %v253 = vsub.s32 %v250, %v252
    %v254 = vrot.slane %v240, %v253
    %v255 = vcombine.high %v247, %v247
    %v256 = vcombine.high %v254, %v254
    %v258 = vunpack.c.l.s4 1966171168
    %v259 = vunpack.c.0.s8 %v258
    %v260 = vlaneseq
    %v261 = vshrl.u32 %v260, 7
    %v262 = vsub.s32 %v259, %v261
    %v263 = vrot.slane %v247, %v262
    %v265 = vunpack.c.l.s4 1966171168
    %v266 = vunpack.c.0.s8 %v265
    %v267 = vlaneseq
    %v268 = vshrl.u32 %v267, 7
    %v269 = vsub.s32 %v266, %v268
    %v270 = vrot.slane %v254, %v269
    %v272 = vunpack.c.l.s4 1966171168
    %v273 = vunpack.c.0.s8 %v272
    %v274 = vlaneseq
    %v275 = vshrl.u32 %v274, 7
    %v276 = vsub.s32 %v273, %v275
    %v277 = vrot.slane %v255, %v276
    %v279 = vunpack.c.l.s4 1966171168
    %v280 = vunpack.c.0.s8 %v279
    %v281 = vlaneseq
    %v282 = vshrl.u32 %v281, 7
    %v283 = vsub.s32 %v280, %v282
    %v284 = vrot.slane %v256, %v283
    %v285 = vcombine.high %v263, %v263
    %v286 = vcombine.high %v270, %v270
    %v287 = vcombine.high %v277, %v277
    %v288 = vcombine.high %v284, %v284
    %v289 = vlaneseq
    %v290 = vshrl.u32 %v289, 7
    %v291 = vsub.s32 0, %v290
    %v292 = vrot.slane %v263, %v291
    %v293 = vlaneseq
    %v294 = vshrl.u32 %v293, 7
    %v295 = vsub.s32 0, %v294
    %v296 = vrot.slane %v277, %v295
    %v297 = vlaneseq
    %v298 = vshrl.u32 %v297, 7
    %v299 = vsub.s32 0, %v298
    %v300 = vrot.slane %v285, %v299
    %v301 = vlaneseq
    %v302 = vshrl.u32 %v301, 7
    %v303 = vsub.s32 0, %v302
    %v304 = vrot.slane %v287, %v303
    %v305 = vlaneseq
    %v306 = vshrl.u32 %v305, 7
    %v307 = vsub.s32 0, %v306
    %v308 = vrot.slane %v270, %v307
    %v309 = vlaneseq
    %v310 = vshrl.u32 %v309, 7
    %v311 = vsub.s32 0, %v310
    %v312 = vrot.slane %v284, %v311
    %v313 = vlaneseq
    %v314 = vshrl.u32 %v313, 7
    %v315 = vsub.s32 0, %v314
    %v316 = vrot.slane %v286, %v315
    %v317 = vlaneseq
    %v318 = vshrl.u32 %v317, 7
    %v319 = vsub.s32 0, %v318
    %v320 = vrot.slane %v288, %v319
    %v329 = vmul.f32 %v292, %v55
    %v330 = vmul.f32 %v296, %v55
    %v331 = vmul.f32 %v300, %v55
    %v332 = vmul.f32 %v304, %v55
    %v333 = vmul.f32 %v308, %v55
    %v334 = vmul.f32 %v312, %v55
    %v335 = vmul.f32 %v316, %v55
    %v336 = vmul.f32 %v320, %v55
    %v337 = vlaneseq
    %v338 = vshrl.u32 %v337, 7
    %v339 = vsub.s32 0, %v338
    %v340 = vrot.slane %v159, %v339
    %342 = vbcast.lane.b32.xlu0 %v340, 256
    %v343 = vpop.permute.xlu0 %342
    %v344 = vlaneseq
    %v345 = vshrl.u32 %v344, 7
    %v346 = vsub.s32 1, %v345
    %v347 = vrot.slane %v159, %v346
    %349 = vbcast.lane.b32.xlu0 %v347, 256
    %v350 = vpop.permute.xlu0 %349
    %v351 = vlaneseq
    %v352 = vshrl.u32 %v351, 7
    %v353 = vsub.s32 2, %v352
    %v354 = vrot.slane %v159, %v353
    %356 = vbcast.lane.b32.xlu0 %v354, 256
    %v357 = vpop.permute.xlu0 %356
    %v358 = vlaneseq
    %v359 = vshrl.u32 %v358, 7
    %v360 = vsub.s32 3, %v359
    %v361 = vrot.slane %v159, %v360
    %363 = vbcast.lane.b32.xlu0 %v361, 256
    %v364 = vpop.permute.xlu0 %363
    %v365 = vlaneseq
    %v366 = vshrl.u32 %v365, 7
    %v367 = vsub.s32 4, %v366
    %v368 = vrot.slane %v159, %v367
    %370 = vbcast.lane.b32.xlu0 %v368, 256
    %v371 = vpop.permute.xlu0 %370
    %v372 = vlaneseq
    %v373 = vshrl.u32 %v372, 7
    %v374 = vsub.s32 5, %v373
    %v375 = vrot.slane %v159, %v374
    %377 = vbcast.lane.b32.xlu0 %v375, 256
    %v378 = vpop.permute.xlu0 %377
    %v379 = vlaneseq
    %v380 = vshrl.u32 %v379, 7
    %v381 = vsub.s32 6, %v380
    %v382 = vrot.slane %v159, %v381
    %384 = vbcast.lane.b32.xlu0 %v382, 256
    %v385 = vpop.permute.xlu0 %384
    %v386 = vlaneseq
    %v387 = vshrl.u32 %v386, 7
    %v388 = vsub.s32 7, %v387
    %v389 = vrot.slane %v159, %v388
    %391 = vbcast.lane.b32.xlu0 %v389, 256
    %v392 = vpop.permute.xlu0 %391
    %v393 = vmul.f32 %v329, %v343
    %v394 = vmul.f32 %v330, %v350
    %v395 = vmul.f32 %v331, %v357
    %v396 = vmul.f32 %v332, %v364
    %v397 = vmul.f32 %v333, %v371
    %v398 = vmul.f32 %v334, %v378
    %v399 = vmul.f32 %v335, %v385
    %v400 = vmul.f32 %v336, %v392
    %v401 = vlaneseq
    %v402 = vshrl.u32 %v401, 7
    %v403 = vsub.s32 0, %v402
    %v404 = vrot.slane %v238, %v403
    %406 = vbcast.lane.b32.xlu0 %v404, 256
    %v407 = vpop.permute.xlu0 %406
    %v408 = vlaneseq
    %v409 = vshrl.u32 %v408, 7
    %v410 = vsub.s32 1, %v409
    %v411 = vrot.slane %v238, %v410
    %413 = vbcast.lane.b32.xlu0 %v411, 256
    %v414 = vpop.permute.xlu0 %413
    %v415 = vlaneseq
    %v416 = vshrl.u32 %v415, 7
    %v417 = vsub.s32 2, %v416
    %v418 = vrot.slane %v238, %v417
    %420 = vbcast.lane.b32.xlu0 %v418, 256
    %v421 = vpop.permute.xlu0 %420
    %v422 = vlaneseq
    %v423 = vshrl.u32 %v422, 7
    %v424 = vsub.s32 3, %v423
    %v425 = vrot.slane %v238, %v424
    %427 = vbcast.lane.b32.xlu0 %v425, 256
    %v428 = vpop.permute.xlu0 %427
    %v429 = vlaneseq
    %v430 = vshrl.u32 %v429, 7
    %v431 = vsub.s32 4, %v430
    %v432 = vrot.slane %v238, %v431
    %434 = vbcast.lane.b32.xlu0 %v432, 256
    %v435 = vpop.permute.xlu0 %434
    %v436 = vlaneseq
    %v437 = vshrl.u32 %v436, 7
    %v438 = vsub.s32 5, %v437
    %v439 = vrot.slane %v238, %v438
    %441 = vbcast.lane.b32.xlu0 %v439, 256
    %v442 = vpop.permute.xlu0 %441
    %v443 = vlaneseq
    %v444 = vshrl.u32 %v443, 7
    %v445 = vsub.s32 6, %v444
    %v446 = vrot.slane %v238, %v445
    %448 = vbcast.lane.b32.xlu0 %v446, 256
    %v449 = vpop.permute.xlu0 %448
    %v450 = vlaneseq
    %v451 = vshrl.u32 %v450, 7
    %v452 = vsub.s32 7, %v451
    %v453 = vrot.slane %v238, %v452
    %455 = vbcast.lane.b32.xlu0 %v453, 256
    %v456 = vpop.permute.xlu0 %455
    %v457 = vmul.f32 %v407, 0.01
    %v458 = vmul.f32 %v414, 0.01
    %v459 = vmul.f32 %v421, 0.01
    %v460 = vmul.f32 %v428, 0.01
    %v461 = vmul.f32 %v435, 0.01
    %v462 = vmul.f32 %v442, 0.01
    %v463 = vmul.f32 %v449, 0.01
    %v464 = vmul.f32 %v456, 0.01
    %v465 = vadd.f32 %v393, %v457
    %v466 = vadd.f32 %v394, %v458
    %v467 = vadd.f32 %v395, %v459
    %v468 = vadd.f32 %v396, %v460
    %v469 = vadd.f32 %v397, %v461
    %v470 = vadd.f32 %v398, %v462
    %v471 = vadd.f32 %v399, %v463
    %v472 = vadd.f32 %v400, %v464
    %v473 = vmul.f32 %v55, %v229
    %v474 = vsub.f32 1.0, %v238
    %v476 = vcombine.high %v474, %v474
    %v478 = vunpack.c.l.s4 1966171168
    %v479 = vunpack.c.0.s8 %v478
    %v480 = vlaneseq
    %v481 = vshrl.u32 %v480, 7
    %v482 = vsub.s32 %v479, %v481
    %v483 = vrot.slane %v474, %v482
    %v485 = vunpack.c.l.s4 1966171168
    %v486 = vunpack.c.0.s8 %v485
    %v487 = vlaneseq
    %v488 = vshrl.u32 %v487, 7
    %v489 = vsub.s32 %v486, %v488
    %v490 = vrot.slane %v476, %v489
    %v491 = vcombine.high %v483, %v483
    %v492 = vcombine.high %v490, %v490
    %v494 = vunpack.c.l.s4 1966171168
    %v495 = vunpack.c.0.s8 %v494
    %v496 = vlaneseq
    %v497 = vshrl.u32 %v496, 7
    %v498 = vsub.s32 %v495, %v497
    %v499 = vrot.slane %v483, %v498
    %v501 = vunpack.c.l.s4 1966171168
    %v502 = vunpack.c.0.s8 %v501
    %v503 = vlaneseq
    %v504 = vshrl.u32 %v503, 7
    %v505 = vsub.s32 %v502, %v504
    %v506 = vrot.slane %v490, %v505
    %v508 = vunpack.c.l.s4 1966171168
    %v509 = vunpack.c.0.s8 %v508
    %v510 = vlaneseq
    %v511 = vshrl.u32 %v510, 7
    %v512 = vsub.s32 %v509, %v511
    %v513 = vrot.slane %v491, %v512
    %v515 = vunpack.c.l.s4 1966171168
    %v516 = vunpack.c.0.s8 %v515
    %v517 = vlaneseq
    %v518 = vshrl.u32 %v517, 7
    %v519 = vsub.s32 %v516, %v518
    %v520 = vrot.slane %v492, %v519
    %v521 = vcombine.high %v499, %v499
    %v522 = vcombine.high %v506, %v506
    %v523 = vcombine.high %v513, %v513
    %v524 = vcombine.high %v520, %v520
    %v525 = vrcp.pop %v465
    %v526 = vmul.f32 %v465, %v525
    %v527 = vmul.f32 %v466, %v525
    %v528 = vmul.f32 %v467, %v525
    %v529 = vmul.f32 %v468, %v525
    %v530 = vmul.f32 %v469, %v525
    %v531 = vmul.f32 %v470, %v525
    %v532 = vmul.f32 %v471, %v525
    %v533 = vmul.f32 %v472, %v525
    %534 = vset.pattern.permute.xlu0 0
    %535 = vperm.xlu0 %534, %v499
    %v536 = vpop.permute.xlu0 %535
    %v538 = vlaneseq
    %v539 = vshrl.u32 %v538, 7
    %v540 = vsub.s32 0, %v539
    %v541 = vrot.slane %v536, %v540
    %542 = vset.pattern.permute.xlu0 0
    %543 = vperm.xlu0 %542, %v513
    %v544 = vpop.permute.xlu0 %543
    %v546 = vlaneseq
    %v547 = vshrl.u32 %v546, 7
    %v548 = vsub.s32 0, %v547
    %v549 = vrot.slane %v544, %v548
    %550 = vset.pattern.permute.xlu0 0
    %551 = vperm.xlu0 %550, %v521
    %v552 = vpop.permute.xlu0 %551
    %v554 = vlaneseq
    %v555 = vshrl.u32 %v554, 7
    %v556 = vsub.s32 0, %v555
    %v557 = vrot.slane %v552, %v556
    %558 = vset.pattern.permute.xlu0 0
    %559 = vperm.xlu0 %558, %v523
    %v560 = vpop.permute.xlu0 %559
    %v562 = vlaneseq
    %v563 = vshrl.u32 %v562, 7
    %v564 = vsub.s32 0, %v563
    %v565 = vrot.slane %v560, %v564
    %566 = vset.pattern.permute.xlu0 0
    %567 = vperm.xlu0 %566, %v506
    %v568 = vpop.permute.xlu0 %567
    %v570 = vlaneseq
    %v571 = vshrl.u32 %v570, 7
    %v572 = vsub.s32 0, %v571
    %v573 = vrot.slane %v568, %v572
    %574 = vset.pattern.permute.xlu0 0
    %575 = vperm.xlu0 %574, %v520
    %v576 = vpop.permute.xlu0 %575
    %v578 = vlaneseq
    %v579 = vshrl.u32 %v578, 7
    %v580 = vsub.s32 0, %v579
    %v581 = vrot.slane %v576, %v580
    %582 = vset.pattern.permute.xlu0 0
    %583 = vperm.xlu0 %582, %v522
    %v584 = vpop.permute.xlu0 %583
    %v586 = vlaneseq
    %v587 = vshrl.u32 %v586, 7
    %v588 = vsub.s32 0, %v587
    %v589 = vrot.slane %v584, %v588
    %590 = vset.pattern.permute.xlu0 0
    %591 = vperm.xlu0 %590, %v524
    %v592 = vpop.permute.xlu0 %591
    %v594 = vlaneseq
    %v595 = vshrl.u32 %v594, 7
    %v596 = vsub.s32 0, %v595
    %v597 = vrot.slane %v592, %v596
    %v598 = vmul.f32 %v526, %v541
    %v599 = vmul.f32 %v527, %v549
    %v600 = vmul.f32 %v528, %v557
    %v601 = vmul.f32 %v529, %v565
    %v602 = vmul.f32 %v530, %v573
    %v603 = vmul.f32 %v531, %v581
    %v604 = vmul.f32 %v532, %v589
    %v605 = vmul.f32 %v533, %v597
    %v606 = vlaneseq
    %v607 = vshrl.u32 %v606, 7
    %v608 = vsub.s32 0, %v607
    %v609 = vrot.slane %v598, %v608
    %v610 = vlaneseq
    %v611 = vshrl.u32 %v610, 7
    %v612 = vsub.s32 0, %v611
    %v613 = vrot.slane %v599, %v612
    %v614 = vlaneseq
    %v615 = vshrl.u32 %v614, 7
    %v616 = vsub.s32 0, %v615
    %v617 = vrot.slane %v600, %v616
    %v618 = vlaneseq
    %v619 = vshrl.u32 %v618, 7
    %v620 = vsub.s32 0, %v619
    %v621 = vrot.slane %v601, %v620
    %v622 = vlaneseq
    %v623 = vshrl.u32 %v622, 7
    %v624 = vsub.s32 0, %v623
    %v625 = vrot.slane %v602, %v624
    %v626 = vlaneseq
    %v627 = vshrl.u32 %v626, 7
    %v628 = vsub.s32 0, %v627
    %v629 = vrot.slane %v603, %v628
    %v630 = vlaneseq
    %v631 = vshrl.u32 %v630, 7
    %v632 = vsub.s32 0, %v631
    %v633 = vrot.slane %v604, %v632
    %v634 = vlaneseq
    %v635 = vshrl.u32 %v634, 7
    %v636 = vsub.s32 0, %v635
    %v637 = vrot.slane %v605, %v636
    %v638 = vmul.f32 %v609, %v465
    %v639 = vmul.f32 %v613, %v465
    %v640 = vmul.f32 %v617, %v465
    %v641 = vmul.f32 %v621, %v465
    %v642 = vmul.f32 %v625, %v465
    %v643 = vmul.f32 %v629, %v465
    %v644 = vmul.f32 %v633, %v465
    %v645 = vmul.f32 %v637, %v465
    %v646 = vsub.f32 %v465, %v638
    %v647 = vsub.f32 %v466, %v639
    %v648 = vsub.f32 %v467, %v640
    %v649 = vsub.f32 %v468, %v641
    %v650 = vsub.f32 %v469, %v642
    %v651 = vsub.f32 %v470, %v643
    %v652 = vsub.f32 %v471, %v644
    %v653 = vsub.f32 %v472, %v645
    %v654 = vlaneseq
    %v655 = vshrl.u32 %v654, 7
    %v656 = vsub.s32 0, %v655
    %v657 = vrot.slane %v473, %v656
    %v658 = vmul.f32 %v598, %v657
    %v659 = vmul.f32 %v599, %v657
    %v660 = vmul.f32 %v600, %v657
    %v661 = vmul.f32 %v601, %v657
    %v662 = vmul.f32 %v602, %v657
    %v663 = vmul.f32 %v603, %v657
    %v664 = vmul.f32 %v604, %v657
    %v665 = vmul.f32 %v605, %v657
    %v674 = vrot.slane %v659, 7
    %vm675 = vcmask 1041409
    %v676 = vsel %vm675, %v674, %v658
    %v677 = vrot.slane %v660, 6
    %vm678 = vcmask 1042434
    %v679 = vsel %vm678, %v677, %v676
    %v680 = vrot.slane %v661, 5
    %vm681 = vcmask 1043459
    %v682 = vsel %vm681, %v680, %v679
    %v683 = vrot.slane %v662, 4
    %vm684 = vcmask 1044484
    %v685 = vsel %vm684, %v683, %v682
    %v686 = vrot.slane %v663, 3
    %vm687 = vcmask 1045509
    %v688 = vsel %vm687, %v686, %v685
    %v689 = vrot.slane %v664, 2
    %vm690 = vcmask 1046534
    %v691 = vsel %vm690, %v689, %v688
    %v692 = vrot.slane %v665, 1
    %vm693 = vcmask 1047559
    %v694 = vsel %vm693, %v692, %v691
    %v696 = vsub.f32 %v473, %v694
    %v697 = vrcp.pop %v647
    %v698 = vmul.f32 %v646, %v697
    %v699 = vmul.f32 %v647, %v697
    %v700 = vmul.f32 %v648, %v697
    %v701 = vmul.f32 %v649, %v697
    %v702 = vmul.f32 %v650, %v697
    %v703 = vmul.f32 %v651, %v697
    %v704 = vmul.f32 %v652, %v697
    %v705 = vmul.f32 %v653, %v697
    %706 = vset.pattern.permute.xlu0 1
    %707 = vperm.xlu0 %706, %v499
    %v708 = vpop.permute.xlu0 %707
    %v710 = vlaneseq
    %v711 = vshrl.u32 %v710, 7
    %v712 = vsub.s32 0, %v711
    %v713 = vrot.slane %v708, %v712
    %714 = vset.pattern.permute.xlu0 1
    %715 = vperm.xlu0 %714, %v513
    %v716 = vpop.permute.xlu0 %715
    %v718 = vlaneseq
    %v719 = vshrl.u32 %v718, 7
    %v720 = vsub.s32 0, %v719
    %v721 = vrot.slane %v716, %v720
    %722 = vset.pattern.permute.xlu0 1
    %723 = vperm.xlu0 %722, %v521
    %v724 = vpop.permute.xlu0 %723
    %v726 = vlaneseq
    %v727 = vshrl.u32 %v726, 7
    %v728 = vsub.s32 0, %v727
    %v729 = vrot.slane %v724, %v728
    %730 = vset.pattern.permute.xlu0 1
    %731 = vperm.xlu0 %730, %v523
    %v732 = vpop.permute.xlu0 %731
    %v734 = vlaneseq
    %v735 = vshrl.u32 %v734, 7
    %v736 = vsub.s32 0, %v735
    %v737 = vrot.slane %v732, %v736
    %738 = vset.pattern.permute.xlu0 1
    %739 = vperm.xlu0 %738, %v506
    %v740 = vpop.permute.xlu0 %739
    %v742 = vlaneseq
    %v743 = vshrl.u32 %v742, 7
    %v744 = vsub.s32 0, %v743
    %v745 = vrot.slane %v740, %v744
    %746 = vset.pattern.permute.xlu0 1
    %747 = vperm.xlu0 %746, %v520
    %v748 = vpop.permute.xlu0 %747
    %v750 = vlaneseq
    %v751 = vshrl.u32 %v750, 7
    %v752 = vsub.s32 0, %v751
    %v753 = vrot.slane %v748, %v752
    %754 = vset.pattern.permute.xlu0 1
    %755 = vperm.xlu0 %754, %v522
    %v756 = vpop.permute.xlu0 %755
    %v758 = vlaneseq
    %v759 = vshrl.u32 %v758, 7
    %v760 = vsub.s32 0, %v759
    %v761 = vrot.slane %v756, %v760
    %762 = vset.pattern.permute.xlu0 1
    %763 = vperm.xlu0 %762, %v524
    %v764 = vpop.permute.xlu0 %763
    %v766 = vlaneseq
    %v767 = vshrl.u32 %v766, 7
    %v768 = vsub.s32 0, %v767
    %v769 = vrot.slane %v764, %v768
    %v770 = vmul.f32 %v698, %v713
    %v771 = vmul.f32 %v699, %v721
    %v772 = vmul.f32 %v700, %v729
    %v773 = vmul.f32 %v701, %v737
    %v774 = vmul.f32 %v702, %v745
    %v775 = vmul.f32 %v703, %v753
    %v776 = vmul.f32 %v704, %v761
    %v777 = vmul.f32 %v705, %v769
    %v778 = vlaneseq
    %v779 = vshrl.u32 %v778, 7
    %v780 = vsub.s32 1, %v779
    %v781 = vrot.slane %v770, %v780
    %v782 = vlaneseq
    %v783 = vshrl.u32 %v782, 7
    %v784 = vsub.s32 1, %v783
    %v785 = vrot.slane %v771, %v784
    %v786 = vlaneseq
    %v787 = vshrl.u32 %v786, 7
    %v788 = vsub.s32 1, %v787
    %v789 = vrot.slane %v772, %v788
    %v790 = vlaneseq
    %v791 = vshrl.u32 %v790, 7
    %v792 = vsub.s32 1, %v791
    %v793 = vrot.slane %v773, %v792
    %v794 = vlaneseq
    %v795 = vshrl.u32 %v794, 7
    %v796 = vsub.s32 1, %v795
    %v797 = vrot.slane %v774, %v796
    %v798 = vlaneseq
    %v799 = vshrl.u32 %v798, 7
    %v800 = vsub.s32 1, %v799
    %v801 = vrot.slane %v775, %v800
    %v802 = vlaneseq
    %v803 = vshrl.u32 %v802, 7
    %v804 = vsub.s32 1, %v803
    %v805 = vrot.slane %v776, %v804
    %v806 = vlaneseq
    %v807 = vshrl.u32 %v806, 7
    %v808 = vsub.s32 1, %v807
    %v809 = vrot.slane %v777, %v808
    %v810 = vmul.f32 %v781, %v647
    %v811 = vmul.f32 %v785, %v647
    %v812 = vmul.f32 %v789, %v647
    %v813 = vmul.f32 %v793, %v647
    %v814 = vmul.f32 %v797, %v647
    %v815 = vmul.f32 %v801, %v647
    %v816 = vmul.f32 %v805, %v647
    %v817 = vmul.f32 %v809, %v647
    %v818 = vsub.f32 %v646, %v810
    %v819 = vsub.f32 %v647, %v811
    %v820 = vsub.f32 %v648, %v812
    %v821 = vsub.f32 %v649, %v813
    %v822 = vsub.f32 %v650, %v814
    %v823 = vsub.f32 %v651, %v815
    %v824 = vsub.f32 %v652, %v816
    %v825 = vsub.f32 %v653, %v817
    %v826 = vlaneseq
    %v827 = vshrl.u32 %v826, 7
    %v828 = vsub.s32 1, %v827
    %v829 = vrot.slane %v696, %v828
    %v830 = vmul.f32 %v770, %v829
    %v831 = vmul.f32 %v771, %v829
    %v832 = vmul.f32 %v772, %v829
    %v833 = vmul.f32 %v773, %v829
    %v834 = vmul.f32 %v774, %v829
    %v835 = vmul.f32 %v775, %v829
    %v836 = vmul.f32 %v776, %v829
    %v837 = vmul.f32 %v777, %v829
    %v846 = vrot.slane %v830, 1
    %v847 = vsel %vm675, %v831, %v846
    %v848 = vrot.slane %v832, 7
    %v849 = vsel %vm678, %v848, %v847
    %v850 = vrot.slane %v833, 6
    %v851 = vsel %vm681, %v850, %v849
    %v852 = vrot.slane %v834, 5
    %v853 = vsel %vm684, %v852, %v851
    %v854 = vrot.slane %v835, 4
    %v855 = vsel %vm687, %v854, %v853
    %v856 = vrot.slane %v836, 3
    %v857 = vsel %vm690, %v856, %v855
    %v858 = vrot.slane %v837, 2
    %v859 = vsel %vm693, %v858, %v857
    %v861 = vsub.f32 %v696, %v859
    %v862 = vrcp.pop %v820
    %v863 = vmul.f32 %v818, %v862
    %v864 = vmul.f32 %v819, %v862
    %v865 = vmul.f32 %v820, %v862
    %v866 = vmul.f32 %v821, %v862
    %v867 = vmul.f32 %v822, %v862
    %v868 = vmul.f32 %v823, %v862
    %v869 = vmul.f32 %v824, %v862
    %v870 = vmul.f32 %v825, %v862
    %871 = vset.pattern.permute.xlu0 2
    %872 = vperm.xlu0 %871, %v499
    %v873 = vpop.permute.xlu0 %872
    %v875 = vlaneseq
    %v876 = vshrl.u32 %v875, 7
    %v877 = vsub.s32 0, %v876
    %v878 = vrot.slane %v873, %v877
    %879 = vset.pattern.permute.xlu0 2
    %880 = vperm.xlu0 %879, %v513
    %v881 = vpop.permute.xlu0 %880
    %v883 = vlaneseq
    %v884 = vshrl.u32 %v883, 7
    %v885 = vsub.s32 0, %v884
    %v886 = vrot.slane %v881, %v885
    %887 = vset.pattern.permute.xlu0 2
    %888 = vperm.xlu0 %887, %v521
    %v889 = vpop.permute.xlu0 %888
    %v891 = vlaneseq
    %v892 = vshrl.u32 %v891, 7
    %v893 = vsub.s32 0, %v892
    %v894 = vrot.slane %v889, %v893
    %895 = vset.pattern.permute.xlu0 2
    %896 = vperm.xlu0 %895, %v523
    %v897 = vpop.permute.xlu0 %896
    %v899 = vlaneseq
    %v900 = vshrl.u32 %v899, 7
    %v901 = vsub.s32 0, %v900
    %v902 = vrot.slane %v897, %v901
    %903 = vset.pattern.permute.xlu0 2
    %904 = vperm.xlu0 %903, %v506
    %v905 = vpop.permute.xlu0 %904
    %v907 = vlaneseq
    %v908 = vshrl.u32 %v907, 7
    %v909 = vsub.s32 0, %v908
    %v910 = vrot.slane %v905, %v909
    %911 = vset.pattern.permute.xlu0 2
    %912 = vperm.xlu0 %911, %v520
    %v913 = vpop.permute.xlu0 %912
    %v915 = vlaneseq
    %v916 = vshrl.u32 %v915, 7
    %v917 = vsub.s32 0, %v916
    %v918 = vrot.slane %v913, %v917
    %919 = vset.pattern.permute.xlu0 2
    %920 = vperm.xlu0 %919, %v522
    %v921 = vpop.permute.xlu0 %920
    %v923 = vlaneseq
    %v924 = vshrl.u32 %v923, 7
    %v925 = vsub.s32 0, %v924
    %v926 = vrot.slane %v921, %v925
    %927 = vset.pattern.permute.xlu0 2
    %928 = vperm.xlu0 %927, %v524
    %v929 = vpop.permute.xlu0 %928
    %v931 = vlaneseq
    %v932 = vshrl.u32 %v931, 7
    %v933 = vsub.s32 0, %v932
    %v934 = vrot.slane %v929, %v933
    %v935 = vmul.f32 %v863, %v878
    %v936 = vmul.f32 %v864, %v886
    %v937 = vmul.f32 %v865, %v894
    %v938 = vmul.f32 %v866, %v902
    %v939 = vmul.f32 %v867, %v910
    %v940 = vmul.f32 %v868, %v918
    %v941 = vmul.f32 %v869, %v926
    %v942 = vmul.f32 %v870, %v934
    %v943 = vlaneseq
    %v944 = vshrl.u32 %v943, 7
    %v945 = vsub.s32 2, %v944
    %v946 = vrot.slane %v935, %v945
    %v947 = vlaneseq
    %v948 = vshrl.u32 %v947, 7
    %v949 = vsub.s32 2, %v948
    %v950 = vrot.slane %v936, %v949
    %v951 = vlaneseq
    %v952 = vshrl.u32 %v951, 7
    %v953 = vsub.s32 2, %v952
    %v954 = vrot.slane %v937, %v953
    %v955 = vlaneseq
    %v956 = vshrl.u32 %v955, 7
    %v957 = vsub.s32 2, %v956
    %v958 = vrot.slane %v938, %v957
    %v959 = vlaneseq
    %v960 = vshrl.u32 %v959, 7
    %v961 = vsub.s32 2, %v960
    %v962 = vrot.slane %v939, %v961
    %v963 = vlaneseq
    %v964 = vshrl.u32 %v963, 7
    %v965 = vsub.s32 2, %v964
    %v966 = vrot.slane %v940, %v965
    %v967 = vlaneseq
    %v968 = vshrl.u32 %v967, 7
    %v969 = vsub.s32 2, %v968
    %v970 = vrot.slane %v941, %v969
    %v971 = vlaneseq
    %v972 = vshrl.u32 %v971, 7
    %v973 = vsub.s32 2, %v972
    %v974 = vrot.slane %v942, %v973
    %v975 = vmul.f32 %v946, %v820
    %v976 = vmul.f32 %v950, %v820
    %v977 = vmul.f32 %v954, %v820
    %v978 = vmul.f32 %v958, %v820
    %v979 = vmul.f32 %v962, %v820
    %v980 = vmul.f32 %v966, %v820
    %v981 = vmul.f32 %v970, %v820
    %v982 = vmul.f32 %v974, %v820
    %v983 = vsub.f32 %v818, %v975
    %v984 = vsub.f32 %v819, %v976
    %v985 = vsub.f32 %v820, %v977
    %v986 = vsub.f32 %v821, %v978
    %v987 = vsub.f32 %v822, %v979
    %v988 = vsub.f32 %v823, %v980
    %v989 = vsub.f32 %v824, %v981
    %v990 = vsub.f32 %v825, %v982
    %v991 = vlaneseq
    %v992 = vshrl.u32 %v991, 7
    %v993 = vsub.s32 2, %v992
    %v994 = vrot.slane %v861, %v993
    %v995 = vmul.f32 %v935, %v994
    %v996 = vmul.f32 %v936, %v994
    %v997 = vmul.f32 %v937, %v994
    %v998 = vmul.f32 %v938, %v994
    %v999 = vmul.f32 %v939, %v994
    %v1000 = vmul.f32 %v940, %v994
    %v1001 = vmul.f32 %v941, %v994
    %v1002 = vmul.f32 %v942, %v994
    %v1011 = vrot.slane %v995, 2
    %v1012 = vrot.slane %v996, 1
    %v1013 = vsel %vm675, %v1012, %v1011
    %v1014 = vsel %vm678, %v997, %v1013
    %v1015 = vrot.slane %v998, 7
    %v1016 = vsel %vm681, %v1015, %v1014
    %v1017 = vrot.slane %v999, 6
    %v1018 = vsel %vm684, %v1017, %v1016
    %v1019 = vrot.slane %v1000, 5
    %v1020 = vsel %vm687, %v1019, %v1018
    %v1021 = vrot.slane %v1001, 4
    %v1022 = vsel %vm690, %v1021, %v1020
    %v1023 = vrot.slane %v1002, 3
    %v1024 = vsel %vm693, %v1023, %v1022
    %v1026 = vsub.f32 %v861, %v1024
    %v1027 = vrcp.pop %v986
    %v1028 = vmul.f32 %v983, %v1027
    %v1029 = vmul.f32 %v984, %v1027
    %v1030 = vmul.f32 %v985, %v1027
    %v1031 = vmul.f32 %v986, %v1027
    %v1032 = vmul.f32 %v987, %v1027
    %v1033 = vmul.f32 %v988, %v1027
    %v1034 = vmul.f32 %v989, %v1027
    %v1035 = vmul.f32 %v990, %v1027
    %1036 = vset.pattern.permute.xlu0 3
    %1037 = vperm.xlu0 %1036, %v499
    %v1038 = vpop.permute.xlu0 %1037
    %v1040 = vlaneseq
    %v1041 = vshrl.u32 %v1040, 7
    %v1042 = vsub.s32 0, %v1041
    %v1043 = vrot.slane %v1038, %v1042
    %1044 = vset.pattern.permute.xlu0 3
    %1045 = vperm.xlu0 %1044, %v513
    %v1046 = vpop.permute.xlu0 %1045
    %v1048 = vlaneseq
    %v1049 = vshrl.u32 %v1048, 7
    %v1050 = vsub.s32 0, %v1049
    %v1051 = vrot.slane %v1046, %v1050
    %1052 = vset.pattern.permute.xlu0 3
    %1053 = vperm.xlu0 %1052, %v521
    %v1054 = vpop.permute.xlu0 %1053
    %v1056 = vlaneseq
    %v1057 = vshrl.u32 %v1056, 7
    %v1058 = vsub.s32 0, %v1057
    %v1059 = vrot.slane %v1054, %v1058
    %1060 = vset.pattern.permute.xlu0 3
    %1061 = vperm.xlu0 %1060, %v523
    %v1062 = vpop.permute.xlu0 %1061
    %v1064 = vlaneseq
    %v1065 = vshrl.u32 %v1064, 7
    %v1066 = vsub.s32 0, %v1065
    %v1067 = vrot.slane %v1062, %v1066
    %1068 = vset.pattern.permute.xlu0 3
    %1069 = vperm.xlu0 %1068, %v506
    %v1070 = vpop.permute.xlu0 %1069
    %v1072 = vlaneseq
    %v1073 = vshrl.u32 %v1072, 7
    %v1074 = vsub.s32 0, %v1073
    %v1075 = vrot.slane %v1070, %v1074
    %1076 = vset.pattern.permute.xlu0 3
    %1077 = vperm.xlu0 %1076, %v520
    %v1078 = vpop.permute.xlu0 %1077
    %v1080 = vlaneseq
    %v1081 = vshrl.u32 %v1080, 7
    %v1082 = vsub.s32 0, %v1081
    %v1083 = vrot.slane %v1078, %v1082
    %1084 = vset.pattern.permute.xlu0 3
    %1085 = vperm.xlu0 %1084, %v522
    %v1086 = vpop.permute.xlu0 %1085
    %v1088 = vlaneseq
    %v1089 = vshrl.u32 %v1088, 7
    %v1090 = vsub.s32 0, %v1089
    %v1091 = vrot.slane %v1086, %v1090
    %1092 = vset.pattern.permute.xlu0 3
    %1093 = vperm.xlu0 %1092, %v524
    %v1094 = vpop.permute.xlu0 %1093
    %v1096 = vlaneseq
    %v1097 = vshrl.u32 %v1096, 7
    %v1098 = vsub.s32 0, %v1097
    %v1099 = vrot.slane %v1094, %v1098
    %v1100 = vmul.f32 %v1028, %v1043
    %v1101 = vmul.f32 %v1029, %v1051
    %v1102 = vmul.f32 %v1030, %v1059
    %v1103 = vmul.f32 %v1031, %v1067
    %v1104 = vmul.f32 %v1032, %v1075
    %v1105 = vmul.f32 %v1033, %v1083
    %v1106 = vmul.f32 %v1034, %v1091
    %v1107 = vmul.f32 %v1035, %v1099
    %v1108 = vlaneseq
    %v1109 = vshrl.u32 %v1108, 7
    %v1110 = vsub.s32 3, %v1109
    %v1111 = vrot.slane %v1100, %v1110
    %v1112 = vlaneseq
    %v1113 = vshrl.u32 %v1112, 7
    %v1114 = vsub.s32 3, %v1113
    %v1115 = vrot.slane %v1101, %v1114
    %v1116 = vlaneseq
    %v1117 = vshrl.u32 %v1116, 7
    %v1118 = vsub.s32 3, %v1117
    %v1119 = vrot.slane %v1102, %v1118
    %v1120 = vlaneseq
    %v1121 = vshrl.u32 %v1120, 7
    %v1122 = vsub.s32 3, %v1121
    %v1123 = vrot.slane %v1103, %v1122
    %v1124 = vlaneseq
    %v1125 = vshrl.u32 %v1124, 7
    %v1126 = vsub.s32 3, %v1125
    %v1127 = vrot.slane %v1104, %v1126
    %v1128 = vlaneseq
    %v1129 = vshrl.u32 %v1128, 7
    %v1130 = vsub.s32 3, %v1129
    %v1131 = vrot.slane %v1105, %v1130
    %v1132 = vlaneseq
    %v1133 = vshrl.u32 %v1132, 7
    %v1134 = vsub.s32 3, %v1133
    %v1135 = vrot.slane %v1106, %v1134
    %v1136 = vlaneseq
    %v1137 = vshrl.u32 %v1136, 7
    %v1138 = vsub.s32 3, %v1137
    %v1139 = vrot.slane %v1107, %v1138
    %v1140 = vmul.f32 %v1111, %v986
    %v1141 = vmul.f32 %v1115, %v986
    %v1142 = vmul.f32 %v1119, %v986
    %v1143 = vmul.f32 %v1123, %v986
    %v1144 = vmul.f32 %v1127, %v986
    %v1145 = vmul.f32 %v1131, %v986
    %v1146 = vmul.f32 %v1135, %v986
    %v1147 = vmul.f32 %v1139, %v986
    %v1148 = vsub.f32 %v983, %v1140
    %v1149 = vsub.f32 %v984, %v1141
    %v1150 = vsub.f32 %v985, %v1142
    %v1151 = vsub.f32 %v986, %v1143
    %v1152 = vsub.f32 %v987, %v1144
    %v1153 = vsub.f32 %v988, %v1145
    %v1154 = vsub.f32 %v989, %v1146
    %v1155 = vsub.f32 %v990, %v1147
    %v1156 = vlaneseq
    %v1157 = vshrl.u32 %v1156, 7
    %v1158 = vsub.s32 3, %v1157
    %v1159 = vrot.slane %v1026, %v1158
    %v1160 = vmul.f32 %v1100, %v1159
    %v1161 = vmul.f32 %v1101, %v1159
    %v1162 = vmul.f32 %v1102, %v1159
    %v1163 = vmul.f32 %v1103, %v1159
    %v1164 = vmul.f32 %v1104, %v1159
    %v1165 = vmul.f32 %v1105, %v1159
    %v1166 = vmul.f32 %v1106, %v1159
    %v1167 = vmul.f32 %v1107, %v1159
    %v1176 = vrot.slane %v1160, 3
    %v1177 = vrot.slane %v1161, 2
    %v1178 = vsel %vm675, %v1177, %v1176
    %v1179 = vrot.slane %v1162, 1
    %v1180 = vsel %vm678, %v1179, %v1178
    %v1181 = vsel %vm681, %v1163, %v1180
    %v1182 = vrot.slane %v1164, 7
    %v1183 = vsel %vm684, %v1182, %v1181
    %v1184 = vrot.slane %v1165, 6
    %v1185 = vsel %vm687, %v1184, %v1183
    %v1186 = vrot.slane %v1166, 5
    %v1187 = vsel %vm690, %v1186, %v1185
    %v1188 = vrot.slane %v1167, 4
    %v1189 = vsel %vm693, %v1188, %v1187
    %v1191 = vsub.f32 %v1026, %v1189
    %v1192 = vrcp.pop %v1152
    %v1193 = vmul.f32 %v1148, %v1192
    %v1194 = vmul.f32 %v1149, %v1192
    %v1195 = vmul.f32 %v1150, %v1192
    %v1196 = vmul.f32 %v1151, %v1192
    %v1197 = vmul.f32 %v1152, %v1192
    %v1198 = vmul.f32 %v1153, %v1192
    %v1199 = vmul.f32 %v1154, %v1192
    %v1200 = vmul.f32 %v1155, %v1192
    %1201 = vset.pattern.permute.xlu0 4
    %1202 = vperm.xlu0 %1201, %v499
    %v1203 = vpop.permute.xlu0 %1202
    %v1205 = vlaneseq
    %v1206 = vshrl.u32 %v1205, 7
    %v1207 = vsub.s32 0, %v1206
    %v1208 = vrot.slane %v1203, %v1207
    %1209 = vset.pattern.permute.xlu0 4
    %1210 = vperm.xlu0 %1209, %v513
    %v1211 = vpop.permute.xlu0 %1210
    %v1213 = vlaneseq
    %v1214 = vshrl.u32 %v1213, 7
    %v1215 = vsub.s32 0, %v1214
    %v1216 = vrot.slane %v1211, %v1215
    %1217 = vset.pattern.permute.xlu0 4
    %1218 = vperm.xlu0 %1217, %v521
    %v1219 = vpop.permute.xlu0 %1218
    %v1221 = vlaneseq
    %v1222 = vshrl.u32 %v1221, 7
    %v1223 = vsub.s32 0, %v1222
    %v1224 = vrot.slane %v1219, %v1223
    %1225 = vset.pattern.permute.xlu0 4
    %1226 = vperm.xlu0 %1225, %v523
    %v1227 = vpop.permute.xlu0 %1226
    %v1229 = vlaneseq
    %v1230 = vshrl.u32 %v1229, 7
    %v1231 = vsub.s32 0, %v1230
    %v1232 = vrot.slane %v1227, %v1231
    %1233 = vset.pattern.permute.xlu0 4
    %1234 = vperm.xlu0 %1233, %v506
    %v1235 = vpop.permute.xlu0 %1234
    %v1237 = vlaneseq
    %v1238 = vshrl.u32 %v1237, 7
    %v1239 = vsub.s32 0, %v1238
    %v1240 = vrot.slane %v1235, %v1239
    %1241 = vset.pattern.permute.xlu0 4
    %1242 = vperm.xlu0 %1241, %v520
    %v1243 = vpop.permute.xlu0 %1242
    %v1245 = vlaneseq
    %v1246 = vshrl.u32 %v1245, 7
    %v1247 = vsub.s32 0, %v1246
    %v1248 = vrot.slane %v1243, %v1247
    %1249 = vset.pattern.permute.xlu0 4
    %1250 = vperm.xlu0 %1249, %v522
    %v1251 = vpop.permute.xlu0 %1250
    %v1253 = vlaneseq
    %v1254 = vshrl.u32 %v1253, 7
    %v1255 = vsub.s32 0, %v1254
    %v1256 = vrot.slane %v1251, %v1255
    %1257 = vset.pattern.permute.xlu0 4
    %1258 = vperm.xlu0 %1257, %v524
    %v1259 = vpop.permute.xlu0 %1258
    %v1261 = vlaneseq
    %v1262 = vshrl.u32 %v1261, 7
    %v1263 = vsub.s32 0, %v1262
    %v1264 = vrot.slane %v1259, %v1263
    %v1265 = vmul.f32 %v1193, %v1208
    %v1266 = vmul.f32 %v1194, %v1216
    %v1267 = vmul.f32 %v1195, %v1224
    %v1268 = vmul.f32 %v1196, %v1232
    %v1269 = vmul.f32 %v1197, %v1240
    %v1270 = vmul.f32 %v1198, %v1248
    %v1271 = vmul.f32 %v1199, %v1256
    %v1272 = vmul.f32 %v1200, %v1264
    %v1273 = vlaneseq
    %v1274 = vshrl.u32 %v1273, 7
    %v1275 = vsub.s32 4, %v1274
    %v1276 = vrot.slane %v1265, %v1275
    %v1277 = vlaneseq
    %v1278 = vshrl.u32 %v1277, 7
    %v1279 = vsub.s32 4, %v1278
    %v1280 = vrot.slane %v1266, %v1279
    %v1281 = vlaneseq
    %v1282 = vshrl.u32 %v1281, 7
    %v1283 = vsub.s32 4, %v1282
    %v1284 = vrot.slane %v1267, %v1283
    %v1285 = vlaneseq
    %v1286 = vshrl.u32 %v1285, 7
    %v1287 = vsub.s32 4, %v1286
    %v1288 = vrot.slane %v1268, %v1287
    %v1289 = vlaneseq
    %v1290 = vshrl.u32 %v1289, 7
    %v1291 = vsub.s32 4, %v1290
    %v1292 = vrot.slane %v1269, %v1291
    %v1293 = vlaneseq
    %v1294 = vshrl.u32 %v1293, 7
    %v1295 = vsub.s32 4, %v1294
    %v1296 = vrot.slane %v1270, %v1295
    %v1297 = vlaneseq
    %v1298 = vshrl.u32 %v1297, 7
    %v1299 = vsub.s32 4, %v1298
    %v1300 = vrot.slane %v1271, %v1299
    %v1301 = vlaneseq
    %v1302 = vshrl.u32 %v1301, 7
    %v1303 = vsub.s32 4, %v1302
    %v1304 = vrot.slane %v1272, %v1303
    %v1305 = vmul.f32 %v1276, %v1152
    %v1306 = vmul.f32 %v1280, %v1152
    %v1307 = vmul.f32 %v1284, %v1152
    %v1308 = vmul.f32 %v1288, %v1152
    %v1309 = vmul.f32 %v1292, %v1152
    %v1310 = vmul.f32 %v1296, %v1152
    %v1311 = vmul.f32 %v1300, %v1152
    %v1312 = vmul.f32 %v1304, %v1152
    %v1313 = vsub.f32 %v1148, %v1305
    %v1314 = vsub.f32 %v1149, %v1306
    %v1315 = vsub.f32 %v1150, %v1307
    %v1316 = vsub.f32 %v1151, %v1308
    %v1317 = vsub.f32 %v1152, %v1309
    %v1318 = vsub.f32 %v1153, %v1310
    %v1319 = vsub.f32 %v1154, %v1311
    %v1320 = vsub.f32 %v1155, %v1312
    %v1321 = vlaneseq
    %v1322 = vshrl.u32 %v1321, 7
    %v1323 = vsub.s32 4, %v1322
    %v1324 = vrot.slane %v1191, %v1323
    %v1325 = vmul.f32 %v1265, %v1324
    %v1326 = vmul.f32 %v1266, %v1324
    %v1327 = vmul.f32 %v1267, %v1324
    %v1328 = vmul.f32 %v1268, %v1324
    %v1329 = vmul.f32 %v1269, %v1324
    %v1330 = vmul.f32 %v1270, %v1324
    %v1331 = vmul.f32 %v1271, %v1324
    %v1332 = vmul.f32 %v1272, %v1324
    %v1341 = vrot.slane %v1325, 4
    %v1342 = vrot.slane %v1326, 3
    %v1343 = vsel %vm675, %v1342, %v1341
    %v1344 = vrot.slane %v1327, 2
    %v1345 = vsel %vm678, %v1344, %v1343
    %v1346 = vrot.slane %v1328, 1
    %v1347 = vsel %vm681, %v1346, %v1345
    %v1348 = vsel %vm684, %v1329, %v1347
    %v1349 = vrot.slane %v1330, 7
    %v1350 = vsel %vm687, %v1349, %v1348
    %v1351 = vrot.slane %v1331, 6
    %v1352 = vsel %vm690, %v1351, %v1350
    %v1353 = vrot.slane %v1332, 5
    %v1354 = vsel %vm693, %v1353, %v1352
    %v1356 = vsub.f32 %v1191, %v1354
    %v1357 = vrcp.pop %v1318
    %v1358 = vmul.f32 %v1313, %v1357
    %v1359 = vmul.f32 %v1314, %v1357
    %v1360 = vmul.f32 %v1315, %v1357
    %v1361 = vmul.f32 %v1316, %v1357
    %v1362 = vmul.f32 %v1317, %v1357
    %v1363 = vmul.f32 %v1318, %v1357
    %v1364 = vmul.f32 %v1319, %v1357
    %v1365 = vmul.f32 %v1320, %v1357
    %1366 = vset.pattern.permute.xlu0 5
    %1367 = vperm.xlu0 %1366, %v499
    %v1368 = vpop.permute.xlu0 %1367
    %v1370 = vlaneseq
    %v1371 = vshrl.u32 %v1370, 7
    %v1372 = vsub.s32 0, %v1371
    %v1373 = vrot.slane %v1368, %v1372
    %1374 = vset.pattern.permute.xlu0 5
    %1375 = vperm.xlu0 %1374, %v513
    %v1376 = vpop.permute.xlu0 %1375
    %v1378 = vlaneseq
    %v1379 = vshrl.u32 %v1378, 7
    %v1380 = vsub.s32 0, %v1379
    %v1381 = vrot.slane %v1376, %v1380
    %1382 = vset.pattern.permute.xlu0 5
    %1383 = vperm.xlu0 %1382, %v521
    %v1384 = vpop.permute.xlu0 %1383
    %v1386 = vlaneseq
    %v1387 = vshrl.u32 %v1386, 7
    %v1388 = vsub.s32 0, %v1387
    %v1389 = vrot.slane %v1384, %v1388
    %1390 = vset.pattern.permute.xlu0 5
    %1391 = vperm.xlu0 %1390, %v523
    %v1392 = vpop.permute.xlu0 %1391
    %v1394 = vlaneseq
    %v1395 = vshrl.u32 %v1394, 7
    %v1396 = vsub.s32 0, %v1395
    %v1397 = vrot.slane %v1392, %v1396
    %1398 = vset.pattern.permute.xlu0 5
    %1399 = vperm.xlu0 %1398, %v506
    %v1400 = vpop.permute.xlu0 %1399
    %v1402 = vlaneseq
    %v1403 = vshrl.u32 %v1402, 7
    %v1404 = vsub.s32 0, %v1403
    %v1405 = vrot.slane %v1400, %v1404
    %1406 = vset.pattern.permute.xlu0 5
    %1407 = vperm.xlu0 %1406, %v520
    %v1408 = vpop.permute.xlu0 %1407
    %v1410 = vlaneseq
    %v1411 = vshrl.u32 %v1410, 7
    %v1412 = vsub.s32 0, %v1411
    %v1413 = vrot.slane %v1408, %v1412
    %1414 = vset.pattern.permute.xlu0 5
    %1415 = vperm.xlu0 %1414, %v522
    %v1416 = vpop.permute.xlu0 %1415
    %v1418 = vlaneseq
    %v1419 = vshrl.u32 %v1418, 7
    %v1420 = vsub.s32 0, %v1419
    %v1421 = vrot.slane %v1416, %v1420
    %1422 = vset.pattern.permute.xlu0 5
    %1423 = vperm.xlu0 %1422, %v524
    %v1424 = vpop.permute.xlu0 %1423
    %v1426 = vlaneseq
    %v1427 = vshrl.u32 %v1426, 7
    %v1428 = vsub.s32 0, %v1427
    %v1429 = vrot.slane %v1424, %v1428
    %v1430 = vmul.f32 %v1358, %v1373
    %v1431 = vmul.f32 %v1359, %v1381
    %v1432 = vmul.f32 %v1360, %v1389
    %v1433 = vmul.f32 %v1361, %v1397
    %v1434 = vmul.f32 %v1362, %v1405
    %v1435 = vmul.f32 %v1363, %v1413
    %v1436 = vmul.f32 %v1364, %v1421
    %v1437 = vmul.f32 %v1365, %v1429
    %v1438 = vlaneseq
    %v1439 = vshrl.u32 %v1438, 7
    %v1440 = vsub.s32 5, %v1439
    %v1441 = vrot.slane %v1430, %v1440
    %v1442 = vlaneseq
    %v1443 = vshrl.u32 %v1442, 7
    %v1444 = vsub.s32 5, %v1443
    %v1445 = vrot.slane %v1431, %v1444
    %v1446 = vlaneseq
    %v1447 = vshrl.u32 %v1446, 7
    %v1448 = vsub.s32 5, %v1447
    %v1449 = vrot.slane %v1432, %v1448
    %v1450 = vlaneseq
    %v1451 = vshrl.u32 %v1450, 7
    %v1452 = vsub.s32 5, %v1451
    %v1453 = vrot.slane %v1433, %v1452
    %v1454 = vlaneseq
    %v1455 = vshrl.u32 %v1454, 7
    %v1456 = vsub.s32 5, %v1455
    %v1457 = vrot.slane %v1434, %v1456
    %v1458 = vlaneseq
    %v1459 = vshrl.u32 %v1458, 7
    %v1460 = vsub.s32 5, %v1459
    %v1461 = vrot.slane %v1435, %v1460
    %v1462 = vlaneseq
    %v1463 = vshrl.u32 %v1462, 7
    %v1464 = vsub.s32 5, %v1463
    %v1465 = vrot.slane %v1436, %v1464
    %v1466 = vlaneseq
    %v1467 = vshrl.u32 %v1466, 7
    %v1468 = vsub.s32 5, %v1467
    %v1469 = vrot.slane %v1437, %v1468
    %v1470 = vmul.f32 %v1441, %v1318
    %v1471 = vmul.f32 %v1445, %v1318
    %v1472 = vmul.f32 %v1449, %v1318
    %v1473 = vmul.f32 %v1453, %v1318
    %v1474 = vmul.f32 %v1457, %v1318
    %v1475 = vmul.f32 %v1461, %v1318
    %v1476 = vmul.f32 %v1465, %v1318
    %v1477 = vmul.f32 %v1469, %v1318
    %v1478 = vsub.f32 %v1313, %v1470
    %v1479 = vsub.f32 %v1314, %v1471
    %v1480 = vsub.f32 %v1315, %v1472
    %v1481 = vsub.f32 %v1316, %v1473
    %v1482 = vsub.f32 %v1317, %v1474
    %v1483 = vsub.f32 %v1318, %v1475
    %v1484 = vsub.f32 %v1319, %v1476
    %v1485 = vsub.f32 %v1320, %v1477
    %v1486 = vlaneseq
    %v1487 = vshrl.u32 %v1486, 7
    %v1488 = vsub.s32 5, %v1487
    %v1489 = vrot.slane %v1356, %v1488
    %v1490 = vmul.f32 %v1430, %v1489
    %v1491 = vmul.f32 %v1431, %v1489
    %v1492 = vmul.f32 %v1432, %v1489
    %v1493 = vmul.f32 %v1433, %v1489
    %v1494 = vmul.f32 %v1434, %v1489
    %v1495 = vmul.f32 %v1435, %v1489
    %v1496 = vmul.f32 %v1436, %v1489
    %v1497 = vmul.f32 %v1437, %v1489
    %v1506 = vrot.slane %v1490, 5
    %v1507 = vrot.slane %v1491, 4
    %v1508 = vsel %vm675, %v1507, %v1506
    %v1509 = vrot.slane %v1492, 3
    %v1510 = vsel %vm678, %v1509, %v1508
    %v1511 = vrot.slane %v1493, 2
    %v1512 = vsel %vm681, %v1511, %v1510
    %v1513 = vrot.slane %v1494, 1
    %v1514 = vsel %vm684, %v1513, %v1512
    %v1515 = vsel %vm687, %v1495, %v1514
    %v1516 = vrot.slane %v1496, 7
    %v1517 = vsel %vm690, %v1516, %v1515
    %v1518 = vrot.slane %v1497, 6
    %v1519 = vsel %vm693, %v1518, %v1517
    %v1521 = vsub.f32 %v1356, %v1519
    %v1522 = vrcp.pop %v1484
    %v1523 = vmul.f32 %v1478, %v1522
    %v1524 = vmul.f32 %v1479, %v1522
    %v1525 = vmul.f32 %v1480, %v1522
    %v1526 = vmul.f32 %v1481, %v1522
    %v1527 = vmul.f32 %v1482, %v1522
    %v1528 = vmul.f32 %v1483, %v1522
    %v1529 = vmul.f32 %v1484, %v1522
    %v1530 = vmul.f32 %v1485, %v1522
    %1531 = vset.pattern.permute.xlu0 6
    %1532 = vperm.xlu0 %1531, %v499
    %v1533 = vpop.permute.xlu0 %1532
    %v1535 = vlaneseq
    %v1536 = vshrl.u32 %v1535, 7
    %v1537 = vsub.s32 0, %v1536
    %v1538 = vrot.slane %v1533, %v1537
    %1539 = vset.pattern.permute.xlu0 6
    %1540 = vperm.xlu0 %1539, %v513
    %v1541 = vpop.permute.xlu0 %1540
    %v1543 = vlaneseq
    %v1544 = vshrl.u32 %v1543, 7
    %v1545 = vsub.s32 0, %v1544
    %v1546 = vrot.slane %v1541, %v1545
    %1547 = vset.pattern.permute.xlu0 6
    %1548 = vperm.xlu0 %1547, %v521
    %v1549 = vpop.permute.xlu0 %1548
    %v1551 = vlaneseq
    %v1552 = vshrl.u32 %v1551, 7
    %v1553 = vsub.s32 0, %v1552
    %v1554 = vrot.slane %v1549, %v1553
    %1555 = vset.pattern.permute.xlu0 6
    %1556 = vperm.xlu0 %1555, %v523
    %v1557 = vpop.permute.xlu0 %1556
    %v1559 = vlaneseq
    %v1560 = vshrl.u32 %v1559, 7
    %v1561 = vsub.s32 0, %v1560
    %v1562 = vrot.slane %v1557, %v1561
    %1563 = vset.pattern.permute.xlu0 6
    %1564 = vperm.xlu0 %1563, %v506
    %v1565 = vpop.permute.xlu0 %1564
    %v1567 = vlaneseq
    %v1568 = vshrl.u32 %v1567, 7
    %v1569 = vsub.s32 0, %v1568
    %v1570 = vrot.slane %v1565, %v1569
    %1571 = vset.pattern.permute.xlu0 6
    %1572 = vperm.xlu0 %1571, %v520
    %v1573 = vpop.permute.xlu0 %1572
    %v1575 = vlaneseq
    %v1576 = vshrl.u32 %v1575, 7
    %v1577 = vsub.s32 0, %v1576
    %v1578 = vrot.slane %v1573, %v1577
    %1579 = vset.pattern.permute.xlu0 6
    %1580 = vperm.xlu0 %1579, %v522
    %v1581 = vpop.permute.xlu0 %1580
    %v1583 = vlaneseq
    %v1584 = vshrl.u32 %v1583, 7
    %v1585 = vsub.s32 0, %v1584
    %v1586 = vrot.slane %v1581, %v1585
    %1587 = vset.pattern.permute.xlu0 6
    %1588 = vperm.xlu0 %1587, %v524
    %v1589 = vpop.permute.xlu0 %1588
    %v1591 = vlaneseq
    %v1592 = vshrl.u32 %v1591, 7
    %v1593 = vsub.s32 0, %v1592
    %v1594 = vrot.slane %v1589, %v1593
    %v1595 = vmul.f32 %v1523, %v1538
    %v1596 = vmul.f32 %v1524, %v1546
    %v1597 = vmul.f32 %v1525, %v1554
    %v1598 = vmul.f32 %v1526, %v1562
    %v1599 = vmul.f32 %v1527, %v1570
    %v1600 = vmul.f32 %v1528, %v1578
    %v1601 = vmul.f32 %v1529, %v1586
    %v1602 = vmul.f32 %v1530, %v1594
    %v1603 = vlaneseq
    %v1604 = vshrl.u32 %v1603, 7
    %v1605 = vsub.s32 6, %v1604
    %v1606 = vrot.slane %v1595, %v1605
    %v1607 = vlaneseq
    %v1608 = vshrl.u32 %v1607, 7
    %v1609 = vsub.s32 6, %v1608
    %v1610 = vrot.slane %v1596, %v1609
    %v1611 = vlaneseq
    %v1612 = vshrl.u32 %v1611, 7
    %v1613 = vsub.s32 6, %v1612
    %v1614 = vrot.slane %v1597, %v1613
    %v1615 = vlaneseq
    %v1616 = vshrl.u32 %v1615, 7
    %v1617 = vsub.s32 6, %v1616
    %v1618 = vrot.slane %v1598, %v1617
    %v1619 = vlaneseq
    %v1620 = vshrl.u32 %v1619, 7
    %v1621 = vsub.s32 6, %v1620
    %v1622 = vrot.slane %v1599, %v1621
    %v1623 = vlaneseq
    %v1624 = vshrl.u32 %v1623, 7
    %v1625 = vsub.s32 6, %v1624
    %v1626 = vrot.slane %v1600, %v1625
    %v1627 = vlaneseq
    %v1628 = vshrl.u32 %v1627, 7
    %v1629 = vsub.s32 6, %v1628
    %v1630 = vrot.slane %v1601, %v1629
    %v1631 = vlaneseq
    %v1632 = vshrl.u32 %v1631, 7
    %v1633 = vsub.s32 6, %v1632
    %v1634 = vrot.slane %v1602, %v1633
    %v1635 = vmul.f32 %v1606, %v1484
    %v1636 = vmul.f32 %v1610, %v1484
    %v1637 = vmul.f32 %v1614, %v1484
    %v1638 = vmul.f32 %v1618, %v1484
    %v1639 = vmul.f32 %v1622, %v1484
    %v1640 = vmul.f32 %v1626, %v1484
    %v1641 = vmul.f32 %v1630, %v1484
    %v1642 = vmul.f32 %v1634, %v1484
    %v1643 = vsub.f32 %v1478, %v1635
    %v1644 = vsub.f32 %v1479, %v1636
    %v1645 = vsub.f32 %v1480, %v1637
    %v1646 = vsub.f32 %v1481, %v1638
    %v1647 = vsub.f32 %v1482, %v1639
    %v1648 = vsub.f32 %v1483, %v1640
    %v1649 = vsub.f32 %v1484, %v1641
    %v1650 = vsub.f32 %v1485, %v1642
    %v1651 = vlaneseq
    %v1652 = vshrl.u32 %v1651, 7
    %v1653 = vsub.s32 6, %v1652
    %v1654 = vrot.slane %v1521, %v1653
    %v1655 = vmul.f32 %v1595, %v1654
    %v1656 = vmul.f32 %v1596, %v1654
    %v1657 = vmul.f32 %v1597, %v1654
    %v1658 = vmul.f32 %v1598, %v1654
    %v1659 = vmul.f32 %v1599, %v1654
    %v1660 = vmul.f32 %v1600, %v1654
    %v1661 = vmul.f32 %v1601, %v1654
    %v1662 = vmul.f32 %v1602, %v1654
    %v1671 = vrot.slane %v1655, 6
    %v1672 = vrot.slane %v1656, 5
    %v1673 = vsel %vm675, %v1672, %v1671
    %v1674 = vrot.slane %v1657, 4
    %v1675 = vsel %vm678, %v1674, %v1673
    %v1676 = vrot.slane %v1658, 3
    %v1677 = vsel %vm681, %v1676, %v1675
    %v1678 = vrot.slane %v1659, 2
    %v1679 = vsel %vm684, %v1678, %v1677
    %v1680 = vrot.slane %v1660, 1
    %v1681 = vsel %vm687, %v1680, %v1679
    %v1682 = vsel %vm690, %v1661, %v1681
    %v1683 = vrot.slane %v1662, 7
    %v1684 = vsel %vm693, %v1683, %v1682
    %v1686 = vsub.f32 %v1521, %v1684
    %v1687 = vrcp.pop %v1650
    %v1688 = vmul.f32 %v1643, %v1687
    %v1689 = vmul.f32 %v1644, %v1687
    %v1690 = vmul.f32 %v1645, %v1687
    %v1691 = vmul.f32 %v1646, %v1687
    %v1692 = vmul.f32 %v1647, %v1687
    %v1693 = vmul.f32 %v1648, %v1687
    %v1694 = vmul.f32 %v1649, %v1687
    %v1695 = vmul.f32 %v1650, %v1687
    %1696 = vset.pattern.permute.xlu0 7
    %1697 = vperm.xlu0 %1696, %v499
    %v1698 = vpop.permute.xlu0 %1697
    %v1700 = vlaneseq
    %v1701 = vshrl.u32 %v1700, 7
    %v1702 = vsub.s32 0, %v1701
    %v1703 = vrot.slane %v1698, %v1702
    %1704 = vset.pattern.permute.xlu0 7
    %1705 = vperm.xlu0 %1704, %v513
    %v1706 = vpop.permute.xlu0 %1705
    %v1708 = vlaneseq
    %v1709 = vshrl.u32 %v1708, 7
    %v1710 = vsub.s32 0, %v1709
    %v1711 = vrot.slane %v1706, %v1710
    %1712 = vset.pattern.permute.xlu0 7
    %1713 = vperm.xlu0 %1712, %v521
    %v1714 = vpop.permute.xlu0 %1713
    %v1716 = vlaneseq
    %v1717 = vshrl.u32 %v1716, 7
    %v1718 = vsub.s32 0, %v1717
    %v1719 = vrot.slane %v1714, %v1718
    %1720 = vset.pattern.permute.xlu0 7
    %1721 = vperm.xlu0 %1720, %v523
    %v1722 = vpop.permute.xlu0 %1721
    %v1724 = vlaneseq
    %v1725 = vshrl.u32 %v1724, 7
    %v1726 = vsub.s32 0, %v1725
    %v1727 = vrot.slane %v1722, %v1726
    %1728 = vset.pattern.permute.xlu0 7
    %1729 = vperm.xlu0 %1728, %v506
    %v1730 = vpop.permute.xlu0 %1729
    %v1732 = vlaneseq
    %v1733 = vshrl.u32 %v1732, 7
    %v1734 = vsub.s32 0, %v1733
    %v1735 = vrot.slane %v1730, %v1734
    %1736 = vset.pattern.permute.xlu0 7
    %1737 = vperm.xlu0 %1736, %v520
    %v1738 = vpop.permute.xlu0 %1737
    %v1740 = vlaneseq
    %v1741 = vshrl.u32 %v1740, 7
    %v1742 = vsub.s32 0, %v1741
    %v1743 = vrot.slane %v1738, %v1742
    %1744 = vset.pattern.permute.xlu0 7
    %1745 = vperm.xlu0 %1744, %v522
    %v1746 = vpop.permute.xlu0 %1745
    %v1748 = vlaneseq
    %v1749 = vshrl.u32 %v1748, 7
    %v1750 = vsub.s32 0, %v1749
    %v1751 = vrot.slane %v1746, %v1750
    %1752 = vset.pattern.permute.xlu0 7
    %1753 = vperm.xlu0 %1752, %v524
    %v1754 = vpop.permute.xlu0 %1753
    %v1756 = vlaneseq
    %v1757 = vshrl.u32 %v1756, 7
    %v1758 = vsub.s32 0, %v1757
    %v1759 = vrot.slane %v1754, %v1758
    %v1760 = vmul.f32 %v1688, %v1703
    %v1761 = vmul.f32 %v1689, %v1711
    %v1762 = vmul.f32 %v1690, %v1719
    %v1763 = vmul.f32 %v1691, %v1727
    %v1764 = vmul.f32 %v1692, %v1735
    %v1765 = vmul.f32 %v1693, %v1743
    %v1766 = vmul.f32 %v1694, %v1751
    %v1767 = vmul.f32 %v1695, %v1759
    %v1768 = vlaneseq
    %v1769 = vshrl.u32 %v1768, 7
    %v1770 = vsub.s32 7, %v1769
    %v1771 = vrot.slane %v1760, %v1770
    %v1772 = vlaneseq
    %v1773 = vshrl.u32 %v1772, 7
    %v1774 = vsub.s32 7, %v1773
    %v1775 = vrot.slane %v1761, %v1774
    %v1776 = vlaneseq
    %v1777 = vshrl.u32 %v1776, 7
    %v1778 = vsub.s32 7, %v1777
    %v1779 = vrot.slane %v1762, %v1778
    %v1780 = vlaneseq
    %v1781 = vshrl.u32 %v1780, 7
    %v1782 = vsub.s32 7, %v1781
    %v1783 = vrot.slane %v1763, %v1782
    %v1784 = vlaneseq
    %v1785 = vshrl.u32 %v1784, 7
    %v1786 = vsub.s32 7, %v1785
    %v1787 = vrot.slane %v1764, %v1786
    %v1788 = vlaneseq
    %v1789 = vshrl.u32 %v1788, 7
    %v1790 = vsub.s32 7, %v1789
    %v1791 = vrot.slane %v1765, %v1790
    %v1792 = vlaneseq
    %v1793 = vshrl.u32 %v1792, 7
    %v1794 = vsub.s32 7, %v1793
    %v1795 = vrot.slane %v1766, %v1794
    %v1796 = vlaneseq
    %v1797 = vshrl.u32 %v1796, 7
    %v1798 = vsub.s32 7, %v1797
    %v1799 = vrot.slane %v1767, %v1798
    %v1800 = vmul.f32 %v1771, %v1650
    %v1801 = vmul.f32 %v1775, %v1650
    %v1802 = vmul.f32 %v1779, %v1650
    %v1803 = vmul.f32 %v1783, %v1650
    %v1804 = vmul.f32 %v1787, %v1650
    %v1805 = vmul.f32 %v1791, %v1650
    %v1806 = vmul.f32 %v1795, %v1650
    %v1807 = vmul.f32 %v1799, %v1650
    %v1808 = vsub.f32 %v1643, %v1800
    %v1809 = vsub.f32 %v1644, %v1801
    %v1810 = vsub.f32 %v1645, %v1802
    %v1811 = vsub.f32 %v1646, %v1803
    %v1812 = vsub.f32 %v1647, %v1804
    %v1813 = vsub.f32 %v1648, %v1805
    %v1814 = vsub.f32 %v1649, %v1806
    %v1815 = vsub.f32 %v1650, %v1807
    %v1816 = vlaneseq
    %v1817 = vshrl.u32 %v1816, 7
    %v1818 = vsub.s32 7, %v1817
    %v1819 = vrot.slane %v1686, %v1818
    %v1820 = vmul.f32 %v1760, %v1819
    %v1821 = vmul.f32 %v1761, %v1819
    %v1822 = vmul.f32 %v1762, %v1819
    %v1823 = vmul.f32 %v1763, %v1819
    %v1824 = vmul.f32 %v1764, %v1819
    %v1825 = vmul.f32 %v1765, %v1819
    %v1826 = vmul.f32 %v1766, %v1819
    %v1827 = vmul.f32 %v1767, %v1819
    %v1836 = vrot.slane %v1820, 7
    %v1837 = vrot.slane %v1821, 6
    %v1838 = vsel %vm675, %v1837, %v1836
    %v1839 = vrot.slane %v1822, 5
    %v1840 = vsel %vm678, %v1839, %v1838
    %v1841 = vrot.slane %v1823, 4
    %v1842 = vsel %vm681, %v1841, %v1840
    %v1843 = vrot.slane %v1824, 3
    %v1844 = vsel %vm684, %v1843, %v1842
    %v1845 = vrot.slane %v1825, 2
    %v1846 = vsel %vm687, %v1845, %v1844
    %v1847 = vrot.slane %v1826, 1
    %v1848 = vsel %vm690, %v1847, %v1846
    %v1849 = vsel %vm693, %v1827, %v1848
    %v1851 = vsub.f32 %v1686, %v1849
    %v1852 = vmul.f32 %v1808, %v407
    %v1853 = vmul.f32 %v1809, %v414
    %v1854 = vmul.f32 %v1810, %v421
    %v1855 = vmul.f32 %v1811, %v428
    %v1856 = vmul.f32 %v1812, %v435
    %v1857 = vmul.f32 %v1813, %v442
    %v1858 = vmul.f32 %v1814, %v449
    %v1859 = vmul.f32 %v1815, %v456
    %v1860 = vsel %vm88, %v1852, 0.0
    %v1861 = vrot.slane %v1860, 4
    %v1862 = vadd.f32 %v1860, %v1861
    %v1863 = vrot.slane %v1862, 2
    %v1864 = vadd.f32 %v1862, %v1863
    %v1865 = vrot.slane %v1864, 1
    %v1866 = vadd.f32 %v1864, %v1865
    %v1867 = vsel %vm88, %v1853, 0.0
    %v1868 = vrot.slane %v1867, 4
    %v1869 = vadd.f32 %v1867, %v1868
    %v1870 = vrot.slane %v1869, 2
    %v1871 = vadd.f32 %v1869, %v1870
    %v1872 = vrot.slane %v1871, 1
    %v1873 = vadd.f32 %v1871, %v1872
    %v1874 = vsel %vm88, %v1854, 0.0
    %v1875 = vrot.slane %v1874, 4
    %v1876 = vadd.f32 %v1874, %v1875
    %v1877 = vrot.slane %v1876, 2
    %v1878 = vadd.f32 %v1876, %v1877
    %v1879 = vrot.slane %v1878, 1
    %v1880 = vadd.f32 %v1878, %v1879
    %v1881 = vsel %vm88, %v1855, 0.0
    %v1882 = vrot.slane %v1881, 4
    %v1883 = vadd.f32 %v1881, %v1882
    %v1884 = vrot.slane %v1883, 2
    %v1885 = vadd.f32 %v1883, %v1884
    %v1886 = vrot.slane %v1885, 1
    %v1887 = vadd.f32 %v1885, %v1886
    %v1888 = vsel %vm88, %v1856, 0.0
    %v1889 = vrot.slane %v1888, 4
    %v1890 = vadd.f32 %v1888, %v1889
    %v1891 = vrot.slane %v1890, 2
    %v1892 = vadd.f32 %v1890, %v1891
    %v1893 = vrot.slane %v1892, 1
    %v1894 = vadd.f32 %v1892, %v1893
    %v1895 = vsel %vm88, %v1857, 0.0
    %v1896 = vrot.slane %v1895, 4
    %v1897 = vadd.f32 %v1895, %v1896
    %v1898 = vrot.slane %v1897, 2
    %v1899 = vadd.f32 %v1897, %v1898
    %v1900 = vrot.slane %v1899, 1
    %v1901 = vadd.f32 %v1899, %v1900
    %v1902 = vsel %vm88, %v1858, 0.0
    %v1903 = vrot.slane %v1902, 4
    %v1904 = vadd.f32 %v1902, %v1903
    %v1905 = vrot.slane %v1904, 2
    %v1906 = vadd.f32 %v1904, %v1905
    %v1907 = vrot.slane %v1906, 1
    %v1908 = vadd.f32 %v1906, %v1907
    %v1909 = vsel %vm88, %v1859, 0.0
    %v1910 = vrot.slane %v1909, 4
    %v1911 = vadd.f32 %v1909, %v1910
    %v1912 = vrot.slane %v1911, 2
    %v1913 = vadd.f32 %v1911, %v1912
    %v1914 = vrot.slane %v1913, 1
    %v1915 = vadd.f32 %v1913, %v1914
    %v1924 = vsel %vm675, %v1873, %v1866
    %v1925 = vsel %vm678, %v1880, %v1924
    %v1926 = vsel %vm681, %v1887, %v1925
    %v1927 = vsel %vm684, %v1894, %v1926
    %v1928 = vsel %vm687, %v1901, %v1927
    %v1929 = vsel %vm690, %v1908, %v1928
    %v1930 = vsel %vm693, %v1915, %v1929
    %v1932 = vrcp.pop %v1930
    %v1933 = vmul.f32 %v1851, %v1932
    %1934 = vxpose.xlu0.b32.start [1/16] %v1933, 128
    %1935 = vxpose.xlu0.b32.cont [2/16] 0.0, 128
    %1936 = vxpose.xlu0.b32.cont [3/16] 0.0, 128
    %1937 = vxpose.xlu0.b32.cont [4/16] 0.0, 128
    %1938 = vxpose.xlu0.b32.cont [5/16] 0.0, 128
    %1939 = vxpose.xlu0.b32.cont [6/16] 0.0, 128
    %1940 = vxpose.xlu0.b32.cont [7/16] 0.0, 128
    %1941 = vxpose.xlu0.b32.cont [8/16] 0.0, 128
    %1942 = vxpose.xlu0.b32.cont [9/16] 0.0, 128
    %1943 = vxpose.xlu0.b32.cont [10/16] 0.0, 128
    %1944 = vxpose.xlu0.b32.cont [11/16] 0.0, 128
    %1945 = vxpose.xlu0.b32.cont [12/16] 0.0, 128
    %1946 = vxpose.xlu0.b32.cont [13/16] 0.0, 128
    %1947 = vxpose.xlu0.b32.cont [14/16] 0.0, 128
    %1948 = vxpose.xlu0.b32.cont [15/16] 0.0, 128
    %1949 = vxpose.xlu0.b32.end [16/16] 0.0, 128
    %v1950 = vpop.trf.xlu0
    %v1951 = vpop.trf.xlu0
    %v1952 = vpop.trf.xlu0
    %v1953 = vpop.trf.xlu0
    %v1954 = vpop.trf.xlu0
    %v1955 = vpop.trf.xlu0
    %v1956 = vpop.trf.xlu0
    %v1957 = vpop.trf.xlu0
    %v1958 = vpop.trf.xlu0
    %v1959 = vpop.trf.xlu0
    %v1960 = vpop.trf.xlu0
    %v1961 = vpop.trf.xlu0
    %v1962 = vpop.trf.xlu0
    %v1963 = vpop.trf.xlu0
    %v1964 = vpop.trf.xlu0
    %v1965 = vpop.trf.xlu0
    %v1967 = vsel %vm88, %v1950, 0
    %1969 = vmatprep.subr.mxu0 0.0
    %1970 = vmatpush1.msra.mxu0 %v53
    %1971 = vmatprep.subr.mxu0 0.0
    %1972 = vmatpush1.msra.mxu0 0.0
    %1973 = vmatprep.subr.mxu0 0.0
    %1974 = vmatpush1.msra.mxu0 0.0
    %1975 = vmatprep.subr.mxu0 0.0
    %1976 = vmatpush1.msra.mxu0 0.0
    %1977 = vmatprep.subr.mxu0 0.0
    %1978 = vmatpush1.msra.mxu0 0.0
    %1979 = vmatprep.subr.mxu0 0.0
    %1980 = vmatpush1.msra.mxu0 0.0
    %1981 = vmatprep.subr.mxu0 0.0
    %1982 = vmatpush1.msra.mxu0 0.0
    %1983 = vmatprep.subr.mxu0 0.0
    %1984 = vmatpush1.msra.mxu0 0.0
    %1985 = vmatprep.subr.mxu0 0.0
    %1986 = vmatpush1.msra.mxu0 0.0
    %1987 = vmatprep.subr.mxu0 0.0
    %1988 = vmatpush1.msra.mxu0 0.0
    %1989 = vmatprep.subr.mxu0 0.0
    %1990 = vmatpush1.msra.mxu0 0.0
    %1991 = vmatprep.subr.mxu0 0.0
    %1992 = vmatpush1.msra.mxu0 0.0
    %1993 = vmatprep.subr.mxu0 0.0
    %1994 = vmatpush1.msra.mxu0 0.0
    %1995 = vmatprep.subr.mxu0 0.0
    %1996 = vmatpush1.msra.mxu0 0.0
    %1997 = vmatprep.subr.mxu0 0.0
    %1998 = vmatpush1.msra.mxu0 0.0
    %1999 = vmatprep.subr.mxu0 0.0
    %2000 = vmatpush1.msra.mxu0 0.0
    %2001 = vmatprep.subr.mxu0 0.0
    %2002 = vmatpush1.msra.mxu0 0.0
    %2003 = vmatprep.subr.mxu0 0.0
    %2004 = vmatpush1.msra.mxu0 0.0
    %2005 = vmatprep.subr.mxu0 0.0
    %2006 = vmatpush1.msra.mxu0 0.0
    %2007 = vmatprep.subr.mxu0 0.0
    %2008 = vmatpush1.msra.mxu0 0.0
    %2009 = vmatprep.subr.mxu0 0.0
    %2010 = vmatpush1.msra.mxu0 0.0
    %2011 = vmatprep.subr.mxu0 0.0
    %2012 = vmatpush1.msra.mxu0 0.0
    %2013 = vmatprep.subr.mxu0 0.0
    %2014 = vmatpush1.msra.mxu0 0.0
    %2015 = vmatprep.subr.mxu0 0.0
    %2016 = vmatpush1.msra.mxu0 0.0
    %2017 = vmatprep.subr.mxu0 0.0
    %2018 = vmatpush1.msra.mxu0 0.0
    %2019 = vmatprep.subr.mxu0 0.0
    %2020 = vmatpush1.msra.mxu0 0.0
    %2021 = vmatprep.subr.mxu0 0.0
    %2022 = vmatpush1.msra.mxu0 0.0
    %2023 = vmatprep.subr.mxu0 0.0
    %2024 = vmatpush1.msra.mxu0 0.0
    %2025 = vmatprep.subr.mxu0 0.0
    %2026 = vmatpush1.msra.mxu0 0.0
    %2027 = vmatprep.subr.mxu0 0.0
    %2028 = vmatpush1.msra.mxu0 0.0
    %2029 = vmatprep.subr.mxu0 0.0
    %2030 = vmatpush1.msra.mxu0 0.0
    %2031 = vmatprep.subr.mxu0 0.0
    %2032 = vmatpush1.msra.mxu0 0.0
    %2033 = vmatprep.mubr.f32.mxu0 0.0
    %2034 = vmatmul.mubr.f32.gmra.mrb[0].mxu0 %v1967
    %v2035 = vpop.f32.mrb[0].mxu0
    %v2036 = vadd.f32 0.0, %v2035
    %v2037 = vpop.f32.mrb[0].mxu0
    %2038 = vdwg.mxu0
    %2039 = vst.msk [vmem:[#allocation9] sm:$0xff] %vm88, %v1933
    %2040 = vst.msk [vmem:[#allocation8] sm:$0xff] %vm88, %v2036
    // Predicated region
    $region26: #{tpu_custom_call.1} parent=1 // pred_check
      _
    $region27: #{tpu_custom_call.1} parent=1 // pred_check_branch
      %2042 = sbr.rel (0) target = $region29
    $region28: #{tpu_custom_call.1} parent=1 // pred_region
      %s2044 = ssub.s32 128, 128
      %2045 = vsyncadd [#allocation4], %s2044
      %s2047 = sshll.u32 [#allocation8], 4
      %s2048 = int_to_ptr.vmem [resolvable:$true] %s2047
      %2050 = dma.vmem_to_hbm [thread:$0]  %s2048, 128, %s3, [#allocation4]
    $region29: #{tpu_custom_call.1} parent=1 // pred_fallthru
      _
    // Predicated region
    $region30: #{tpu_custom_call.1} parent=1 // pred_check
      _
    $region31: #{tpu_custom_call.1} parent=1 // pred_check_branch
      %2052 = sbr.rel (0) target = $region33
    $region32: #{tpu_custom_call.1} parent=1 // pred_region
      %s2054 = ssub.s32 128, 128
      %2055 = vsyncadd [#allocation10], %s2054
      %s2057 = sshll.u32 [#allocation9], 4
      %s2058 = int_to_ptr.vmem [resolvable:$true] %s2057
      %2060 = dma.vmem_to_hbm [thread:$0]  %s2058, 128, %s4, [#allocation10]
    $region33: #{tpu_custom_call.1} parent=1 // pred_fallthru
      _
    // Predicated region
    $region34: #{tpu_custom_call.1} parent=1 // pred_check
      _
    $region35: #{tpu_custom_call.1} parent=1 // pred_check_branch
      %2062 = sbr.rel (0) target = $region37
    $region36: #{tpu_custom_call.1} parent=1 // pred_region
      %2063 = dma.done [#allocation4], 128
    $region37: #{tpu_custom_call.1} parent=1 // pred_fallthru
      _
    // Predicated region
    $region38: #{tpu_custom_call.1} parent=1 // pred_check
      _
    $region39: #{tpu_custom_call.1} parent=1 // pred_check_branch
      %2065 = sbr.rel (0) target = $region41
    $region40: #{tpu_custom_call.1} parent=1 // pred_region
      %2066 = dma.done [#allocation10], 128
    $region41: #{tpu_custom_call.1} parent=1 // pred_fallthru
      _
    %2067 = vsyncpa [#allocation3], 1
    %2068 = vsyncpa [#allocation6], 1
    %2069 = vsyncpa [#allocation4], 1
    %2070 = vsyncpa [#allocation10], 1

</llo_original>
